<compile_context>
chip_gen: v6e
topology: v6e:2x2x1
jax: 0.10.0
libtpu: 0.0.40
codegen_flags: <defaults>
</compile_context>

<pallas_src>
import functools
import math

import jax
import jax.numpy as jnp
from jax.experimental import pallas as pl
from jax.experimental.pallas import tpu as pltpu  # noqa: F401  (TPU backend)

# ---- module constants (match the PyTorch source) ----------------------------
HEAD_LINEAR_LAYERS = 3
POOLING_LAYER = 2          # AdaptiveMaxPool2d((1,1)) path
SLIDING_WINDOW = 10
CNN_OUTPUT_SIZE = 129

# ---- small, forward-consistent hyperparameters -------------------------------
BATCH = 1                  # fc_out input width 129*10 forces B*T == sliding_window
SEQ = SLIDING_WINDOW       # T = 10
IN_C, IN_H, IN_W = 3, 16, 16
REDUCTION = 4              # stand-in backbone reduction factor
BB_OUT_CH = 8              # backbone.out_channels[-1]
POOL_CHANNELS = 2
FC_HIDDEN = 32
ANCHORS = 8
OUT_DIM = ANCHORS * 2 + 1  # 17

# NOTE: ceil(H/REDUCTION) matches the VALID-padded stand-in conv only because
# 16 % 4 == 0; an assertion in forward() guards this.
HF = math.ceil(IN_H / REDUCTION)   # 4
WF = math.ceil(IN_W / REDUCTION)   # 4
NUM_CHANNELS = POOL_CHANNELS * HF * WF   # 32
H1 = int(FC_HIDDEN * 1.75)  # 56
H2 = int(FC_HIDDEN * 1.25)  # 40
H3 = FC_HIDDEN              # 32


# ---- Pallas kernel: 1x1 conv + global max pool + fc stack + fc_out ----------
# Single invocation; all refs are full arrays resident in VMEM.
def head_kernel(feat_ref, wc_ref, bc_ref,
                w1_ref, b1_ref, w2_ref, b2_ref,
                w3_ref, b3_ref, w4_ref, b4_ref,
                wo_ref, bo_ref, out_ref, *, n_frames, spatial):
    k = wc_ref.shape[1]

    # 1x1 Conv2d == per-pixel channel matmul over all N*S pixels at once.
    y = jnp.dot(feat_ref[...], wc_ref[...],
                preferred_element_type=jnp.float32)                      # (N*S, K)

    # AdaptiveMaxPool2d((1,1)) == global max over spatial positions per frame.
    # Bias added after the max (max is shift-invariant -> identical result),
    # keeping K on the lane axis and the reduce on the sublane axis.
    # spatial == 16 is a multiple of 8 -> the sublane split is tile-aligned.
    fea = jnp.max(y.reshape(n_frames, spatial, k), axis=1) + bc_ref[...]  # (N, K)

    # fc head (headLinearlayers == 3): 3x (Linear + ReLU) + Linear,
    # batched over all N frames.
    h = jnp.maximum(
        jnp.dot(fea, w1_ref[...], preferred_element_type=jnp.float32) + b1_ref[...], 0.0)
    h = jnp.maximum(
        jnp.dot(h, w2_ref[...], preferred_element_type=jnp.float32) + b2_ref[...], 0.0)
    h = jnp.maximum(
        jnp.dot(h, w3_ref[...], preferred_element_type=jnp.float32) + b3_ref[...], 0.0)
    h = jnp.dot(h, w4_ref[...], preferred_element_type=jnp.float32) + b4_ref[...]  # (N, 129)

    # fc_out: reg = relu(concat_n h_n) @ Wo + bo == bo + sum_n relu(h_n) @ Wo[n].
    # Static unroll over the (resident) Wo: in-register dots, one final store.
    hr = jnp.maximum(h, 0.0)                                             # (N, 129)
    wo = wo_ref[...]                                                     # (N, 129, OUT)
    out = bo_ref[...]                                                    # (1, OUT)
    for i in range(n_frames):
        out = out + jnp.dot(hr[i:i + 1, :], wo[i],
                            preferred_element_type=jnp.float32)
    out_ref[...] = out


def regression_head(feat_flat, p, *, n_frames, spatial):
    """feat_flat: (N*S, Cb) backbone features (channels-last, spatial flattened)."""
    kernel = functools.partial(head_kernel, n_frames=n_frames, spatial=spatial)
    # No grid: one kernel invocation, all operands fully resident in VMEM
    # (total < 1 MiB, far under the 64 MiB of the smallest-VMEM generation).
    return pl.pallas_call(
        kernel,
        out_shape=jax.ShapeDtypeStruct((1, OUT_DIM), jnp.float32),
    )(feat_flat, p["wc"], p["bc"], p["w1"], p["b1"], p["w2"], p["b2"],
      p["w3"], p["b3"], p["w4"], p["b4"], p["wo"], p["bo"])


# ---- stand-in backbone (plain JAX glue) --------------------------------------
# TODO(synk): the real ResNet/EfficientNet/MobileNet/DenseNet backbone is an
# external pretrained module; stand-in = single strided conv with the same
# reduction factor and out_channels, so head shapes match the PyTorch model.
def standin_backbone(x_nchw, wb, bb):
    y = jax.lax.conv_general_dilated(
        x_nchw, wb, window_strides=(REDUCTION, REDUCTION), padding="VALID",
        dimension_numbers=("NCHW", "OIHW", "NCHW"))
    return y + bb[None, :, None, None]


@jax.jit
def forward(x, p):
    B, T, C, H, W = x.shape
    xr = x.reshape(B * T, C, H, W)
    fmap = standin_backbone(xr, p["wb"], p["bb"])                 # (N, Cb, Hf, Wf)
    N, Cb, Hf, Wf = fmap.shape
    assert (Hf, Wf) == (HF, WF), "backbone output does not match ceil(H/red)"
    # Lane-dense 2-D feature slab for the kernel: (N*S, Cb).
    feat = jnp.transpose(fmap, (0, 2, 3, 1)).reshape(N * Hf * Wf, Cb)
    return regression_head(feat, p, n_frames=N, spatial=Hf * Wf)  # (1, anchors*2+1)


# ---- deterministic parameter init (PyTorch default-style uniform) -----------
def make_params(key):
    ks = jax.random.split(key, 16)

    def uni(k, shape, fan_in):
        b = 1.0 / math.sqrt(fan_in)
        return jax.random.uniform(k, shape, jnp.float32, -b, b)

    p = {}
    # stand-in backbone conv: (Cb, C_in, R, R)
    fin_bb = IN_C * REDUCTION * REDUCTION
    p["wb"] = uni(ks[0], (BB_OUT_CH, IN_C, REDUCTION, REDUCTION), fin_bb)
    p["bb"] = uni(ks[1], (BB_OUT_CH,), fin_bb)
    # 1x1 conv (Cb -> num_channels), stored as (Cb, K) for the kernel
    p["wc"] = uni(ks[2], (BB_OUT_CH, NUM_CHANNELS), BB_OUT_CH)
    p["bc"] = uni(ks[3], (1, NUM_CHANNELS), BB_OUT_CH)
    # fc head (weights stored as (in, out), i.e. transposed vs torch Linear)
    p["w1"] = uni(ks[4], (NUM_CHANNELS, H1), NUM_CHANNELS)
    p["b1"] = uni(ks[5], (1, H1), NUM_CHANNELS)
    p["w2"] = uni(ks[6], (H1, H2), H1)
    p["b2"] = uni(ks[7], (1, H2), H1)
    p["w3"] = uni(ks[8], (H2, H3), H2)
    p["b3"] = uni(ks[9], (1, H3), H2)
    p["w4"] = uni(ks[10], (H3, CNN_OUTPUT_SIZE), H3)
    p["b4"] = uni(ks[11], (1, CNN_OUTPUT_SIZE), H3)
    # fc_out: torch (OUT_DIM, 129*T) -> transposed -> (T, 129, OUT_DIM)
    fin_out = CNN_OUTPUT_SIZE * SLIDING_WINDOW
    p["wo"] = uni(ks[12], (fin_out, OUT_DIM), fin_out).reshape(
        SLIDING_WINDOW, CNN_OUTPUT_SIZE, OUT_DIM)
    p["bo"] = uni(ks[13], (1, OUT_DIM), fin_out)
    return p


# ---- pure-JAX reference for correctness check --------------------------------
def reference_forward(x, p):
    hp = jax.lax.Precision.HIGHEST
    B, T, C, H, W = x.shape
    xr = x.reshape(B * T, C, H, W)
    fmap = standin_backbone(xr, p["wb"], p["bb"])
    N, Cb, Hf, Wf = fmap.shape
    feat = jnp.transpose(fmap, (0, 2, 3, 1)).reshape(N, Hf * Wf, Cb)
    y = jnp.einsum("nsc,ck->nsk", feat, p["wc"], precision=hp) + p["bc"]
    fea = jnp.max(y, axis=1)
    d = lambda a, w: jnp.dot(a, w, precision=hp)
    h = jax.nn.relu(d(fea, p["w1"]) + p["b1"])
    h = jax.nn.relu(d(h, p["w2"]) + p["b2"])
    h = jax.nn.relu(d(h, p["w3"]) + p["b3"])
    h = d(h, p["w4"]) + p["b4"]                        # (N, 129)
    flat = jax.nn.relu(h.reshape(1, -1))               # (1, N*129)
    wo_flat = p["wo"].reshape(N * CNN_OUTPUT_SIZE, OUT_DIM)
    return d(flat, wo_flat) + p["bo"]                  # (1, OUT_DIM)


if __name__ == "__main__":
    key = jax.random.PRNGKey(0)
    k_in, k_par = jax.random.split(key)
    params = make_params(k_par)
    x = jax.random.normal(k_in, (BATCH, SEQ, IN_C, IN_H, IN_W), jnp.float32)

    reg = jax.block_until_ready(forward(x, params))
    ref = jax.block_until_ready(reference_forward(x, params))

    assert reg.shape == (1, OUT_DIM), reg.shape
    assert jnp.allclose(reg, ref, rtol=1e-3, atol=1e-3), (reg, ref)
    print("KERNEL_OK")
</pallas_src>

<mosaic_0001>
module attributes {stable_mosaic.version = 11 : i64} {
  func.func @head_kernel(%arg0: memref<160x8xf32, #tpu.memory_space<vmem>>, %arg1: memref<8x32xf32, #tpu.memory_space<vmem>>, %arg2: memref<1x32xf32, #tpu.memory_space<vmem>>, %arg3: memref<32x56xf32, #tpu.memory_space<vmem>>, %arg4: memref<1x56xf32, #tpu.memory_space<vmem>>, %arg5: memref<56x40xf32, #tpu.memory_space<vmem>>, %arg6: memref<1x40xf32, #tpu.memory_space<vmem>>, %arg7: memref<40x32xf32, #tpu.memory_space<vmem>>, %arg8: memref<1x32xf32, #tpu.memory_space<vmem>>, %arg9: memref<32x129xf32, #tpu.memory_space<vmem>>, %arg10: memref<1x129xf32, #tpu.memory_space<vmem>>, %arg11: memref<10x129x17xf32, #tpu.memory_space<vmem>>, %arg12: memref<1x17xf32, #tpu.memory_space<vmem>>, %arg13: memref<1x17xf32, #tpu.memory_space<vmem>>) attributes {dimension_semantics = [], scalar_prefetch = 0 : i64, scratch_operands = 0 : i64, tpu.core_type = #tpu.core_type<tc>} {
    %c0 = arith.constant 0 : index
    %c0_0 = arith.constant 0 : index
    %0 = vector.load %arg0[%c0, %c0_0] : memref<160x8xf32, #tpu.memory_space<vmem>>, vector<160x8xf32>
    %c0_1 = arith.constant 0 : index
    %c0_2 = arith.constant 0 : index
    %1 = vector.load %arg1[%c0_1, %c0_2] : memref<8x32xf32, #tpu.memory_space<vmem>>, vector<8x32xf32>
    %cst = arith.constant dense<0.000000e+00> : vector<160x32xf32>
    %2 = tpu.matmul %0, %1, %cst {dimension_numbers = #tpu.dot_dimension_numbers<[1], [0], [0], [1], [0, 0, 1, 1], [], []>} : vector<160x8xf32>, vector<8x32xf32>, vector<160x32xf32> -> vector<160x32xf32>
    %3 = vector.shape_cast %2 : vector<160x32xf32> to vector<10x16x32xf32>
    %cst_3 = arith.constant dense<0xFF800000> : vector<10x32xf32>
    %4 = vector.multi_reduction <maximumf>, %3, %cst_3 [1] : vector<10x16x32xf32> to vector<10x32xf32>
    %c0_4 = arith.constant 0 : index
    %c0_5 = arith.constant 0 : index
    %5 = vector.load %arg2[%c0_4, %c0_5] : memref<1x32xf32, #tpu.memory_space<vmem>>, vector<1x32xf32>
    %6 = vector.broadcast %5 : vector<1x32xf32> to vector<10x32xf32>
    %7 = arith.addf %4, %6 : vector<10x32xf32>
    %c0_6 = arith.constant 0 : index
    %c0_7 = arith.constant 0 : index
    %8 = vector.load %arg3[%c0_6, %c0_7] : memref<32x56xf32, #tpu.memory_space<vmem>>, vector<32x56xf32>
    %cst_8 = arith.constant dense<0.000000e+00> : vector<10x56xf32>
    %9 = tpu.matmul %7, %8, %cst_8 {dimension_numbers = #tpu.dot_dimension_numbers<[1], [0], [0], [1], [0, 0, 1, 1], [], []>} : vector<10x32xf32>, vector<32x56xf32>, vector<10x56xf32> -> vector<10x56xf32>
    %c0_9 = arith.constant 0 : index
    %c0_10 = arith.constant 0 : index
    %10 = vector.load %arg4[%c0_9, %c0_10] : memref<1x56xf32, #tpu.memory_space<vmem>>, vector<1x56xf32>
    %11 = vector.broadcast %10 : vector<1x56xf32> to vector<10x56xf32>
    %12 = arith.addf %9, %11 : vector<10x56xf32>
    %cst_11 = arith.constant 0.000000e+00 : f32
    %13 = vector.broadcast %cst_11 : f32 to vector<10x56xf32>
    %14 = arith.maximumf %12, %13 : vector<10x56xf32>
    %c0_12 = arith.constant 0 : index
    %c0_13 = arith.constant 0 : index
    %15 = vector.load %arg5[%c0_12, %c0_13] : memref<56x40xf32, #tpu.memory_space<vmem>>, vector<56x40xf32>
    %cst_14 = arith.constant dense<0.000000e+00> : vector<10x40xf32>
    %16 = tpu.matmul %14, %15, %cst_14 {dimension_numbers = #tpu.dot_dimension_numbers<[1], [0], [0], [1], [0, 0, 1, 1], [], []>} : vector<10x56xf32>, vector<56x40xf32>, vector<10x40xf32> -> vector<10x40xf32>
    %c0_15 = arith.constant 0 : index
    %c0_16 = arith.constant 0 : index
    %17 = vector.load %arg6[%c0_15, %c0_16] : memref<1x40xf32, #tpu.memory_space<vmem>>, vector<1x40xf32>
    %18 = vector.broadcast %17 : vector<1x40xf32> to vector<10x40xf32>
    %19 = arith.addf %16, %18 : vector<10x40xf32>
    %cst_17 = arith.constant 0.000000e+00 : f32
    %20 = vector.broadcast %cst_17 : f32 to vector<10x40xf32>
    %21 = arith.maximumf %19, %20 : vector<10x40xf32>
    %c0_18 = arith.constant 0 : index
    %c0_19 = arith.constant 0 : index
    %22 = vector.load %arg7[%c0_18, %c0_19] : memref<40x32xf32, #tpu.memory_space<vmem>>, vector<40x32xf32>
    %cst_20 = arith.constant dense<0.000000e+00> : vector<10x32xf32>
    %23 = tpu.matmul %21, %22, %cst_20 {dimension_numbers = #tpu.dot_dimension_numbers<[1], [0], [0], [1], [0, 0, 1, 1], [], []>} : vector<10x40xf32>, vector<40x32xf32>, vector<10x32xf32> -> vector<10x32xf32>
    %c0_21 = arith.constant 0 : index
    %c0_22 = arith.constant 0 : index
    %24 = vector.load %arg8[%c0_21, %c0_22] : memref<1x32xf32, #tpu.memory_space<vmem>>, vector<1x32xf32>
    %25 = vector.broadcast %24 : vector<1x32xf32> to vector<10x32xf32>
    %26 = arith.addf %23, %25 : vector<10x32xf32>
    %cst_23 = arith.constant 0.000000e+00 : f32
    %27 = vector.broadcast %cst_23 : f32 to vector<10x32xf32>
    %28 = arith.maximumf %26, %27 : vector<10x32xf32>
    %c0_24 = arith.constant 0 : index
    %c0_25 = arith.constant 0 : index
    %29 = vector.load %arg9[%c0_24, %c0_25] : memref<32x129xf32, #tpu.memory_space<vmem>>, vector<32x129xf32>
    %cst_26 = arith.constant dense<0.000000e+00> : vector<10x129xf32>
    %30 = tpu.matmul %28, %29, %cst_26 {dimension_numbers = #tpu.dot_dimension_numbers<[1], [0], [0], [1], [0, 0, 1, 1], [], []>} : vector<10x32xf32>, vector<32x129xf32>, vector<10x129xf32> -> vector<10x129xf32>
    %c0_27 = arith.constant 0 : index
    %c0_28 = arith.constant 0 : index
    %31 = vector.load %arg10[%c0_27, %c0_28] : memref<1x129xf32, #tpu.memory_space<vmem>>, vector<1x129xf32>
    %32 = vector.broadcast %31 : vector<1x129xf32> to vector<10x129xf32>
    %33 = arith.addf %30, %32 : vector<10x129xf32>
    %cst_29 = arith.constant 0.000000e+00 : f32
    %34 = vector.broadcast %cst_29 : f32 to vector<10x129xf32>
    %35 = arith.maximumf %33, %34 : vector<10x129xf32>
    %c0_30 = arith.constant 0 : index
    %c0_31 = arith.constant 0 : index
    %c0_32 = arith.constant 0 : index
    %36 = vector.load %arg11[%c0_30, %c0_31, %c0_32] : memref<10x129x17xf32, #tpu.memory_space<vmem>>, vector<10x129x17xf32>
    %c0_33 = arith.constant 0 : index
    %c0_34 = arith.constant 0 : index
    %37 = vector.load %arg12[%c0_33, %c0_34] : memref<1x17xf32, #tpu.memory_space<vmem>>, vector<1x17xf32>
    %38 = vector.extract_strided_slice %35 {offsets = [0, 0], sizes = [1, 129], strides = [1, 1]} : vector<10x129xf32> to vector<1x129xf32>
    %39 = vector.extract_strided_slice %36 {offsets = [0, 0, 0], sizes = [1, 129, 17], strides = [1, 1, 1]} : vector<10x129x17xf32> to vector<1x129x17xf32>
    %40 = vector.shape_cast %39 : vector<1x129x17xf32> to vector<129x17xf32>
    %cst_35 = arith.constant dense<0.000000e+00> : vector<1x17xf32>
    %41 = tpu.matmul %38, %40, %cst_35 {dimension_numbers = #tpu.dot_dimension_numbers<[1], [0], [0], [1], [0, 0, 1, 1], [], []>} : vector<1x129xf32>, vector<129x17xf32>, vector<1x17xf32> -> vector<1x17xf32>
    %42 = arith.addf %37, %41 : vector<1x17xf32>
    %43 = vector.extract_strided_slice %35 {offsets = [1, 0], sizes = [1, 129], strides = [1, 1]} : vector<10x129xf32> to vector<1x129xf32>
    %44 = vector.extract_strided_slice %36 {offsets = [1, 0, 0], sizes = [1, 129, 17], strides = [1, 1, 1]} : vector<10x129x17xf32> to vector<1x129x17xf32>
    %45 = vector.shape_cast %44 : vector<1x129x17xf32> to vector<129x17xf32>
    %cst_36 = arith.constant dense<0.000000e+00> : vector<1x17xf32>
    %46 = tpu.matmul %43, %45, %cst_36 {dimension_numbers = #tpu.dot_dimension_numbers<[1], [0], [0], [1], [0, 0, 1, 1], [], []>} : vector<1x129xf32>, vector<129x17xf32>, vector<1x17xf32> -> vector<1x17xf32>
    %47 = arith.addf %42, %46 : vector<1x17xf32>
    %48 = vector.extract_strided_slice %35 {offsets = [2, 0], sizes = [1, 129], strides = [1, 1]} : vector<10x129xf32> to vector<1x129xf32>
    %49 = vector.extract_strided_slice %36 {offsets = [2, 0, 0], sizes = [1, 129, 17], strides = [1, 1, 1]} : vector<10x129x17xf32> to vector<1x129x17xf32>
    %50 = vector.shape_cast %49 : vector<1x129x17xf32> to vector<129x17xf32>
    %cst_37 = arith.constant dense<0.000000e+00> : vector<1x17xf32>
    %51 = tpu.matmul %48, %50, %cst_37 {dimension_numbers = #tpu.dot_dimension_numbers<[1], [0], [0], [1], [0, 0, 1, 1], [], []>} : vector<1x129xf32>, vector<129x17xf32>, vector<1x17xf32> -> vector<1x17xf32>
    %52 = arith.addf %47, %51 : vector<1x17xf32>
    %53 = vector.extract_strided_slice %35 {offsets = [3, 0], sizes = [1, 129], strides = [1, 1]} : vector<10x129xf32> to vector<1x129xf32>
    %54 = vector.extract_strided_slice %36 {offsets = [3, 0, 0], sizes = [1, 129, 17], strides = [1, 1, 1]} : vector<10x129x17xf32> to vector<1x129x17xf32>
    %55 = vector.shape_cast %54 : vector<1x129x17xf32> to vector<129x17xf32>
    %cst_38 = arith.constant dense<0.000000e+00> : vector<1x17xf32>
    %56 = tpu.matmul %53, %55, %cst_38 {dimension_numbers = #tpu.dot_dimension_numbers<[1], [0], [0], [1], [0, 0, 1, 1], [], []>} : vector<1x129xf32>, vector<129x17xf32>, vector<1x17xf32> -> vector<1x17xf32>
    %57 = arith.addf %52, %56 : vector<1x17xf32>
    %58 = vector.extract_strided_slice %35 {offsets = [4, 0], sizes = [1, 129], strides = [1, 1]} : vector<10x129xf32> to vector<1x129xf32>
    %59 = vector.extract_strided_slice %36 {offsets = [4, 0, 0], sizes = [1, 129, 17], strides = [1, 1, 1]} : vector<10x129x17xf32> to vector<1x129x17xf32>
    %60 = vector.shape_cast %59 : vector<1x129x17xf32> to vector<129x17xf32>
    %cst_39 = arith.constant dense<0.000000e+00> : vector<1x17xf32>
    %61 = tpu.matmul %58, %60, %cst_39 {dimension_numbers = #tpu.dot_dimension_numbers<[1], [0], [0], [1], [0, 0, 1, 1], [], []>} : vector<1x129xf32>, vector<129x17xf32>, vector<1x17xf32> -> vector<1x17xf32>
    %62 = arith.addf %57, %61 : vector<1x17xf32>
    %63 = vector.extract_strided_slice %35 {offsets = [5, 0], sizes = [1, 129], strides = [1, 1]} : vector<10x129xf32> to vector<1x129xf32>
    %64 = vector.extract_strided_slice %36 {offsets = [5, 0, 0], sizes = [1, 129, 17], strides = [1, 1, 1]} : vector<10x129x17xf32> to vector<1x129x17xf32>
    %65 = vector.shape_cast %64 : vector<1x129x17xf32> to vector<129x17xf32>
    %cst_40 = arith.constant dense<0.000000e+00> : vector<1x17xf32>
    %66 = tpu.matmul %63, %65, %cst_40 {dimension_numbers = #tpu.dot_dimension_numbers<[1], [0], [0], [1], [0, 0, 1, 1], [], []>} : vector<1x129xf32>, vector<129x17xf32>, vector<1x17xf32> -> vector<1x17xf32>
    %67 = arith.addf %62, %66 : vector<1x17xf32>
    %68 = vector.extract_strided_slice %35 {offsets = [6, 0], sizes = [1, 129], strides = [1, 1]} : vector<10x129xf32> to vector<1x129xf32>
    %69 = vector.extract_strided_slice %36 {offsets = [6, 0, 0], sizes = [1, 129, 17], strides = [1, 1, 1]} : vector<10x129x17xf32> to vector<1x129x17xf32>
    %70 = vector.shape_cast %69 : vector<1x129x17xf32> to vector<129x17xf32>
    %cst_41 = arith.constant dense<0.000000e+00> : vector<1x17xf32>
    %71 = tpu.matmul %68, %70, %cst_41 {dimension_numbers = #tpu.dot_dimension_numbers<[1], [0], [0], [1], [0, 0, 1, 1], [], []>} : vector<1x129xf32>, vector<129x17xf32>, vector<1x17xf32> -> vector<1x17xf32>
    %72 = arith.addf %67, %71 : vector<1x17xf32>
    %73 = vector.extract_strided_slice %35 {offsets = [7, 0], sizes = [1, 129], strides = [1, 1]} : vector<10x129xf32> to vector<1x129xf32>
    %74 = vector.extract_strided_slice %36 {offsets = [7, 0, 0], sizes = [1, 129, 17], strides = [1, 1, 1]} : vector<10x129x17xf32> to vector<1x129x17xf32>
    %75 = vector.shape_cast %74 : vector<1x129x17xf32> to vector<129x17xf32>
    %cst_42 = arith.constant dense<0.000000e+00> : vector<1x17xf32>
    %76 = tpu.matmul %73, %75, %cst_42 {dimension_numbers = #tpu.dot_dimension_numbers<[1], [0], [0], [1], [0, 0, 1, 1], [], []>} : vector<1x129xf32>, vector<129x17xf32>, vector<1x17xf32> -> vector<1x17xf32>
    %77 = arith.addf %72, %76 : vector<1x17xf32>
    %78 = vector.extract_strided_slice %35 {offsets = [8, 0], sizes = [1, 129], strides = [1, 1]} : vector<10x129xf32> to vector<1x129xf32>
    %79 = vector.extract_strided_slice %36 {offsets = [8, 0, 0], sizes = [1, 129, 17], strides = [1, 1, 1]} : vector<10x129x17xf32> to vector<1x129x17xf32>
    %80 = vector.shape_cast %79 : vector<1x129x17xf32> to vector<129x17xf32>
    %cst_43 = arith.constant dense<0.000000e+00> : vector<1x17xf32>
    %81 = tpu.matmul %78, %80, %cst_43 {dimension_numbers = #tpu.dot_dimension_numbers<[1], [0], [0], [1], [0, 0, 1, 1], [], []>} : vector<1x129xf32>, vector<129x17xf32>, vector<1x17xf32> -> vector<1x17xf32>
    %82 = arith.addf %77, %81 : vector<1x17xf32>
    %83 = vector.extract_strided_slice %35 {offsets = [9, 0], sizes = [1, 129], strides = [1, 1]} : vector<10x129xf32> to vector<1x129xf32>
    %84 = vector.extract_strided_slice %36 {offsets = [9, 0, 0], sizes = [1, 129, 17], strides = [1, 1, 1]} : vector<10x129x17xf32> to vector<1x129x17xf32>
    %85 = vector.shape_cast %84 : vector<1x129x17xf32> to vector<129x17xf32>
    %cst_44 = arith.constant dense<0.000000e+00> : vector<1x17xf32>
    %86 = tpu.matmul %83, %85, %cst_44 {dimension_numbers = #tpu.dot_dimension_numbers<[1], [0], [0], [1], [0, 0, 1, 1], [], []>} : vector<1x129xf32>, vector<129x17xf32>, vector<1x17xf32> -> vector<1x17xf32>
    %87 = arith.addf %82, %86 : vector<1x17xf32>
    %c0_45 = arith.constant 0 : index
    %c0_46 = arith.constant 0 : index
    %88 = vector.load %arg13[%c0_45, %c0_46] : memref<1x17xf32, #tpu.memory_space<vmem>>, vector<1x17xf32>
    tpu.vector_store %arg13[%c0_45, %c0_46], %87 {strides = array<i32>} : memref<1x17xf32, #tpu.memory_space<vmem>>, vector<1x17xf32>,
    return
  }
}

</mosaic_0001>

<llo_original>
// kernel: forward.1
$region0: #{forward.1}
  #allocation0 [shape = 'u32[]', space=smem, size = 0x4, offset = 0x4, fixed_abs, tag = 'smem constant byte address 0x4 - core index']
  #allocation1 [shape = 'u32[144,128]{1,0:T(1,128)}', space=vmem, size = 0x12000, scoped, tag = 'internal scratch']
  %s0 = inlined_call_operand.vmem [shape: f32[160,8], index: 0, kind: input, shape index: {}]
  %s1 = inlined_call_operand.vmem [shape: f32[8,32], index: 1, kind: input, shape index: {}]
  %s2 = inlined_call_operand.vmem [shape: f32[1,32], index: 2, kind: input, shape index: {}]
  %s3 = inlined_call_operand.vmem [shape: f32[32,56], index: 3, kind: input, shape index: {}]
  %s4 = inlined_call_operand.vmem [shape: f32[1,56], index: 4, kind: input, shape index: {}]
  %s5 = inlined_call_operand.vmem [shape: f32[56,40], index: 5, kind: input, shape index: {}]
  %s6 = inlined_call_operand.vmem [shape: f32[1,40], index: 6, kind: input, shape index: {}]
  %s7 = inlined_call_operand.vmem [shape: f32[40,32], index: 7, kind: input, shape index: {}]
  %s8 = inlined_call_operand.vmem [shape: f32[1,32], index: 8, kind: input, shape index: {}]
  %s9 = inlined_call_operand.vmem [shape: f32[32,129], index: 9, kind: input, shape index: {}]
  %s10 = inlined_call_operand.vmem [shape: f32[1,129], index: 10, kind: input, shape index: {}]
  %s11 = inlined_call_operand.vmem [shape: f32[10,129,17], index: 11, kind: input, shape index: {}]
  %s12 = inlined_call_operand.vmem [shape: f32[1,17], index: 12, kind: input, shape index: {}]
  %s13 = inlined_call_operand.hbm [shape: f32[1,17], index: 13, kind: output, shape index: {}]
  %s14 = sld [smem:[#allocation0]]
  $region62: #{forward.1} parent=0
    _
  %s16 = ssub.s32 1, %s14
  %s17 = scalar_select 0, %s16, %s14
  $region1: #{forward.1} parent=0
    #allocation2 [shape = 'u8[512]{0}', space=vmem, size = 0x400, scoped, tag = 'output window, operand 0, single buffered']
    #allocation3 [shape = 's32[1]{0}', space=sflag, size = 0x4, scoped, tag = 'scoped memory for forward.1']
    %18 = vsyncpa [#allocation3], 0
    // Predicated region
    $region2: #{forward.1} parent=1 // pred_check
      _
    $region3: #{forward.1} parent=1 // pred_check_branch
      %20 = sbr.rel (0) target = $region5
    $region4: #{forward.1} parent=1 // pred_region
      _
    $region5: #{forward.1} parent=1 // pred_fallthru
      _
    // Predicated region
    $region6: #{forward.1} parent=1 // pred_check
      _
    $region7: #{forward.1} parent=1 // pred_check_branch
      %22 = sbr.rel (0) target = $region9
    $region8: #{forward.1} parent=1 // pred_region
      _
    $region9: #{forward.1} parent=1 // pred_fallthru
      _
    // Predicated region
    $region10: #{forward.1} parent=1 // pred_check
      _
    $region11: #{forward.1} parent=1 // pred_check_branch
      %24 = sbr.rel (0) target = $region13
    $region12: #{forward.1} parent=1 // pred_region
      _
    $region13: #{forward.1} parent=1 // pred_fallthru
      _
    // Predicated region
    $region14: #{forward.1} parent=1 // pred_check
      _
    $region15: #{forward.1} parent=1 // pred_check_branch
      %26 = sbr.rel (0) target = $region17
    $region16: #{forward.1} parent=1 // pred_region
      _
    $region17: #{forward.1} parent=1 // pred_fallthru
      _
    // Predicated region
    $region18: #{forward.1} parent=1 // pred_check
      _
    $region19: #{forward.1} parent=1 // pred_check_branch
      %28 = sbr.rel (0) target = $region21
    $region20: #{forward.1} parent=1 // pred_region
      _
    $region21: #{forward.1} parent=1 // pred_fallthru
      _
    // Predicated region
    $region22: #{forward.1} parent=1 // pred_check
      _
    $region23: #{forward.1} parent=1 // pred_check_branch
      %30 = sbr.rel (0) target = $region25
    $region24: #{forward.1} parent=1 // pred_region
      _
    $region25: #{forward.1} parent=1 // pred_fallthru
      _
    // Predicated region
    $region26: #{forward.1} parent=1 // pred_check
      _
    $region27: #{forward.1} parent=1 // pred_check_branch
      %32 = sbr.rel (0) target = $region29
    $region28: #{forward.1} parent=1 // pred_region
      _
    $region29: #{forward.1} parent=1 // pred_fallthru
      _
    // Predicated region
    $region30: #{forward.1} parent=1 // pred_check
      _
    $region31: #{forward.1} parent=1 // pred_check_branch
      %34 = sbr.rel (0) target = $region33
    $region32: #{forward.1} parent=1 // pred_region
      _
    $region33: #{forward.1} parent=1 // pred_fallthru
      _
    // Predicated region
    $region34: #{forward.1} parent=1 // pred_check
      _
    $region35: #{forward.1} parent=1 // pred_check_branch
      %36 = sbr.rel (0) target = $region37
    $region36: #{forward.1} parent=1 // pred_region
      _
    $region37: #{forward.1} parent=1 // pred_fallthru
      _
    // Predicated region
    $region38: #{forward.1} parent=1 // pred_check
      _
    $region39: #{forward.1} parent=1 // pred_check_branch
      %38 = sbr.rel (0) target = $region41
    $region40: #{forward.1} parent=1 // pred_region
      _
    $region41: #{forward.1} parent=1 // pred_fallthru
      _
    // Predicated region
    $region42: #{forward.1} parent=1 // pred_check
      _
    $region43: #{forward.1} parent=1 // pred_check_branch
      %40 = sbr.rel (0) target = $region45
    $region44: #{forward.1} parent=1 // pred_region
      _
    $region45: #{forward.1} parent=1 // pred_fallthru
      _
    // Predicated region
    $region46: #{forward.1} parent=1 // pred_check
      _
    $region47: #{forward.1} parent=1 // pred_check_branch
      %42 = sbr.rel (0) target = $region49
    $region48: #{forward.1} parent=1 // pred_region
      _
    $region49: #{forward.1} parent=1 // pred_fallthru
      _
    // Predicated region
    $region50: #{forward.1} parent=1 // pred_check
      _
    $region51: #{forward.1} parent=1 // pred_check_branch
      %44 = sbr.rel (0) target = $region53
    $region52: #{forward.1} parent=1 // pred_region
      _
    $region53: #{forward.1} parent=1 // pred_fallthru
      _
    %v45 = vld [vmem:[%s0] sm:$0xff]
    %v46 = vld [vmem:[%s0 + $0x8] sm:$0xff]
    %v47 = vld [vmem:[%s0 + $0x10] sm:$0xff]
    %v48 = vld [vmem:[%s0 + $0x18] sm:$0xff]
    %v49 = vld [vmem:[%s0 + $0x20] sm:$0xff]
    %v50 = vld [vmem:[%s0 + $0x28] sm:$0xff]
    %v51 = vld [vmem:[%s0 + $0x30] sm:$0xff]
    %v52 = vld [vmem:[%s0 + $0x38] sm:$0xff]
    %v53 = vld [vmem:[%s0 + $0x40] sm:$0xff]
    %v54 = vld [vmem:[%s0 + $0x48] sm:$0xff]
    %v55 = vld [vmem:[%s0 + $0x50] sm:$0xff]
    %v56 = vld [vmem:[%s0 + $0x58] sm:$0xff]
    %v57 = vld [vmem:[%s0 + $0x60] sm:$0xff]
    %v58 = vld [vmem:[%s0 + $0x68] sm:$0xff]
    %v59 = vld [vmem:[%s0 + $0x70] sm:$0xff]
    %v60 = vld [vmem:[%s0 + $0x78] sm:$0xff]
    %v61 = vld [vmem:[%s0 + $0x80] sm:$0xff]
    %v62 = vld [vmem:[%s0 + $0x88] sm:$0xff]
    %v63 = vld [vmem:[%s0 + $0x90] sm:$0xff]
    %v64 = vld [vmem:[%s0 + $0x98] sm:$0xff]
    %v65 = vld [vmem:[%s1] sm:$0xff]
    %vm66 = vcmask 64512
    %v68 = vsel %vm66, %v45, 0
    %v71 = vsel %vm66, %v46, 0
    %v74 = vsel %vm66, %v47, 0
    %v77 = vsel %vm66, %v48, 0
    %v80 = vsel %vm66, %v49, 0
    %v83 = vsel %vm66, %v50, 0
    %v86 = vsel %vm66, %v51, 0
    %v89 = vsel %vm66, %v52, 0
    %v92 = vsel %vm66, %v53, 0
    %v95 = vsel %vm66, %v54, 0
    %v98 = vsel %vm66, %v55, 0
    %v101 = vsel %vm66, %v56, 0
    %v104 = vsel %vm66, %v57, 0
    %v107 = vsel %vm66, %v58, 0
    %v110 = vsel %vm66, %v59, 0
    %v113 = vsel %vm66, %v60, 0
    %v116 = vsel %vm66, %v61, 0
    %v119 = vsel %vm66, %v62, 0
    %v122 = vsel %vm66, %v63, 0
    %v125 = vsel %vm66, %v64, 0
    %127 = vmatprep.subr.mxu0 0.0
    %128 = vmatpush1.msra.mxu0 0.0
    %129 = vmatprep.subr.mxu0 0.0
    %130 = vmatpush1.msra.mxu0 0.0
    %131 = vmatprep.subr.mxu0 0.0
    %132 = vmatpush1.msra.mxu0 0.0
    %133 = vmatprep.subr.mxu0 0.0
    %134 = vmatpush1.msra.mxu0 0.0
    %135 = vmatprep.subr.mxu0 0.0
    %136 = vmatpush1.msra.mxu0 0.0
    %137 = vmatprep.subr.mxu0 0.0
    %138 = vmatpush1.msra.mxu0 0.0
    %139 = vmatprep.subr.mxu0 0.0
    %140 = vmatpush1.msra.mxu0 0.0
    %141 = vmatprep.subr.mxu0 0.0
    %142 = vmatpush1.msra.mxu0 0.0
    %143 = vmatprep.subr.mxu0 0.0
    %144 = vmatpush1.msra.mxu0 0.0
    %145 = vmatprep.subr.mxu0 0.0
    %146 = vmatpush1.msra.mxu0 0.0
    %147 = vmatprep.subr.mxu0 0.0
    %148 = vmatpush1.msra.mxu0 0.0
    %149 = vmatprep.subr.mxu0 0.0
    %150 = vmatpush1.msra.mxu0 0.0
    %151 = vmatprep.subr.mxu0 0.0
    %152 = vmatpush1.msra.mxu0 0.0
    %153 = vmatprep.subr.mxu0 0.0
    %154 = vmatpush1.msra.mxu0 0.0
    %155 = vmatprep.subr.mxu0 0.0
    %156 = vmatpush1.msra.mxu0 0.0
    %157 = vmatprep.subr.mxu0 0.0
    %158 = vmatpush1.msra.mxu0 %v65
    %159 = vmatprep.subr.mxu0 0.0
    %160 = vmatpush2.msra.mxu0 0.0
    %161 = vmatprep.subr.mxu0 0.0
    %162 = vmatpush2.msra.mxu0 0.0
    %163 = vmatprep.subr.mxu0 0.0
    %164 = vmatpush2.msra.mxu0 0.0
    %165 = vmatprep.subr.mxu0 0.0
    %166 = vmatpush2.msra.mxu0 0.0
    %167 = vmatprep.subr.mxu0 0.0
    %168 = vmatpush2.msra.mxu0 0.0
    %169 = vmatprep.subr.mxu0 0.0
    %170 = vmatpush2.msra.mxu0 0.0
    %171 = vmatprep.subr.mxu0 0.0
    %172 = vmatpush2.msra.mxu0 0.0
    %173 = vmatprep.subr.mxu0 0.0
    %174 = vmatpush2.msra.mxu0 0.0
    %175 = vmatprep.subr.mxu0 0.0
    %176 = vmatpush2.msra.mxu0 0.0
    %177 = vmatprep.subr.mxu0 0.0
    %178 = vmatpush2.msra.mxu0 0.0
    %179 = vmatprep.subr.mxu0 0.0
    %180 = vmatpush2.msra.mxu0 0.0
    %181 = vmatprep.subr.mxu0 0.0
    %182 = vmatpush2.msra.mxu0 0.0
    %183 = vmatprep.subr.mxu0 0.0
    %184 = vmatpush2.msra.mxu0 0.0
    %185 = vmatprep.subr.mxu0 0.0
    %186 = vmatpush2.msra.mxu0 0.0
    %187 = vmatprep.subr.mxu0 0.0
    %188 = vmatpush2.msra.mxu0 0.0
    %189 = vmatprep.subr.mxu0 0.0
    %190 = vmatpush2.msra.mxu0 0.0
    %191 = vmatprep.mubr.f32.mxu0 0.0
    %192 = vmatmul.mubr.f32.gmra.mxu0 %v68
    %v193 = vpop.f32.mrf.mxu0
    %v194 = vadd.f32 0.0, %v193
    %v195 = vpop.f32.mrf.mxu0
    %196 = vmatprep.mubr.f32.mxu0 0.0
    %197 = vmatmul.mubr.f32.gmra.mxu0 %v71
    %v198 = vpop.f32.mrf.mxu0
    %v199 = vadd.f32 0.0, %v198
    %v200 = vpop.f32.mrf.mxu0
    %201 = vmatprep.mubr.f32.mxu0 0.0
    %202 = vmatmul.mubr.f32.gmra.mxu0 %v74
    %v203 = vpop.f32.mrf.mxu0
    %v204 = vadd.f32 0.0, %v203
    %v205 = vpop.f32.mrf.mxu0
    %206 = vmatprep.mubr.f32.mxu0 0.0
    %207 = vmatmul.mubr.f32.gmra.mxu0 %v77
    %v208 = vpop.f32.mrf.mxu0
    %v209 = vadd.f32 0.0, %v208
    %v210 = vpop.f32.mrf.mxu0
    %211 = vmatprep.mubr.f32.mxu0 0.0
    %212 = vmatmul.mubr.f32.gmra.mxu0 %v80
    %v213 = vpop.f32.mrf.mxu0
    %v214 = vadd.f32 0.0, %v213
    %v215 = vpop.f32.mrf.mxu0
    %216 = vmatprep.mubr.f32.mxu0 0.0
    %217 = vmatmul.mubr.f32.gmra.mxu0 %v83
    %v218 = vpop.f32.mrf.mxu0
    %v219 = vadd.f32 0.0, %v218
    %v220 = vpop.f32.mrf.mxu0
    %221 = vmatprep.mubr.f32.mxu0 0.0
    %222 = vmatmul.mubr.f32.gmra.mxu0 %v86
    %v223 = vpop.f32.mrf.mxu0
    %v224 = vadd.f32 0.0, %v223
    %v225 = vpop.f32.mrf.mxu0
    %226 = vmatprep.mubr.f32.mxu0 0.0
    %227 = vmatmul.mubr.f32.gmra.mxu0 %v89
    %v228 = vpop.f32.mrf.mxu0
    %v229 = vadd.f32 0.0, %v228
    %v230 = vpop.f32.mrf.mxu0
    %231 = vmatprep.mubr.f32.mxu0 0.0
    %232 = vmatmul.mubr.f32.gmra.mxu0 %v92
    %v233 = vpop.f32.mrf.mxu0
    %v234 = vadd.f32 0.0, %v233
    %v235 = vpop.f32.mrf.mxu0
    %236 = vmatprep.mubr.f32.mxu0 0.0
    %237 = vmatmul.mubr.f32.gmra.mxu0 %v95
    %v238 = vpop.f32.mrf.mxu0
    %v239 = vadd.f32 0.0, %v238
    %v240 = vpop.f32.mrf.mxu0
    %241 = vmatprep.mubr.f32.mxu0 0.0
    %242 = vmatmul.mubr.f32.gmra.mxu0 %v98
    %v243 = vpop.f32.mrf.mxu0
    %v244 = vadd.f32 0.0, %v243
    %v245 = vpop.f32.mrf.mxu0
    %246 = vmatprep.mubr.f32.mxu0 0.0
    %247 = vmatmul.mubr.f32.gmra.mxu0 %v101
    %v248 = vpop.f32.mrf.mxu0
    %v249 = vadd.f32 0.0, %v248
    %v250 = vpop.f32.mrf.mxu0
    %251 = vmatprep.mubr.f32.mxu0 0.0
    %252 = vmatmul.mubr.f32.gmra.mxu0 %v104
    %v253 = vpop.f32.mrf.mxu0
    %v254 = vadd.f32 0.0, %v253
    %v255 = vpop.f32.mrf.mxu0
    %256 = vmatprep.mubr.f32.mxu0 0.0
    %257 = vmatmul.mubr.f32.gmra.mxu0 %v107
    %v258 = vpop.f32.mrf.mxu0
    %v259 = vadd.f32 0.0, %v258
    %v260 = vpop.f32.mrf.mxu0
    %261 = vmatprep.mubr.f32.mxu0 0.0
    %262 = vmatmul.mubr.f32.gmra.mxu0 %v110
    %v263 = vpop.f32.mrf.mxu0
    %v264 = vadd.f32 0.0, %v263
    %v265 = vpop.f32.mrf.mxu0
    %266 = vmatprep.mubr.f32.mxu0 0.0
    %267 = vmatmul.mubr.f32.gmra.mxu0 %v113
    %v268 = vpop.f32.mrf.mxu0
    %v269 = vadd.f32 0.0, %v268
    %v270 = vpop.f32.mrf.mxu0
    %271 = vmatprep.mubr.f32.mxu0 0.0
    %272 = vmatmul.mubr.f32.gmra.mxu0 %v116
    %v273 = vpop.f32.mrf.mxu0
    %v274 = vadd.f32 0.0, %v273
    %v275 = vpop.f32.mrf.mxu0
    %276 = vmatprep.mubr.f32.mxu0 0.0
    %277 = vmatmul.mubr.f32.gmra.mxu0 %v119
    %v278 = vpop.f32.mrf.mxu0
    %v279 = vadd.f32 0.0, %v278
    %v280 = vpop.f32.mrf.mxu0
    %281 = vmatprep.mubr.f32.mxu0 0.0
    %282 = vmatmul.mubr.f32.gmra.mxu0 %v122
    %v283 = vpop.f32.mrf.mxu0
    %v284 = vadd.f32 0.0, %v283
    %v285 = vpop.f32.mrf.mxu0
    %286 = vmatprep.mubr.f32.mxu0 0.0
    %287 = vmatmul.mubr.f32.gmra.mxu0 %v125
    %v288 = vpop.f32.mrf.mxu0
    %v289 = vadd.f32 0.0, %v288
    %v290 = vpop.f32.mrf.mxu0
    %291 = vdwg.mxu0
    %vm292 = vcmask 261120
    %v293 = vsel %vm292, %v194, -inf
    %v294 = vsel %vm292, %v199, -inf
    %v295 = vmax.f32 %v293, %v294
    %v296 = vrot.slane %v295, 4
    %v297 = vmax.f32 %v295, %v296
    %v298 = vrot.slane %v297, 2
    %v299 = vmax.f32 %v297, %v298
    %v300 = vrot.slane %v299, 1
    %v301 = vmax.f32 %v299, %v300
    %v302 = vsel %vm292, %v204, -inf
    %v303 = vsel %vm292, %v209, -inf
    %v304 = vmax.f32 %v302, %v303
    %v305 = vrot.slane %v304, 4
    %v306 = vmax.f32 %v304, %v305
    %v307 = vrot.slane %v306, 2
    %v308 = vmax.f32 %v306, %v307
    %v309 = vrot.slane %v308, 1
    %v310 = vmax.f32 %v308, %v309
    %v311 = vsel %vm292, %v214, -inf
    %v312 = vsel %vm292, %v219, -inf
    %v313 = vmax.f32 %v311, %v312
    %v314 = vrot.slane %v313, 4
    %v315 = vmax.f32 %v313, %v314
    %v316 = vrot.slane %v315, 2
    %v317 = vmax.f32 %v315, %v316
    %v318 = vrot.slane %v317, 1
    %v319 = vmax.f32 %v317, %v318
    %v320 = vsel %vm292, %v224, -inf
    %v321 = vsel %vm292, %v229, -inf
    %v322 = vmax.f32 %v320, %v321
    %v323 = vrot.slane %v322, 4
    %v324 = vmax.f32 %v322, %v323
    %v325 = vrot.slane %v324, 2
    %v326 = vmax.f32 %v324, %v325
    %v327 = vrot.slane %v326, 1
    %v328 = vmax.f32 %v326, %v327
    %v329 = vsel %vm292, %v234, -inf
    %v330 = vsel %vm292, %v239, -inf
    %v331 = vmax.f32 %v329, %v330
    %v332 = vrot.slane %v331, 4
    %v333 = vmax.f32 %v331, %v332
    %v334 = vrot.slane %v333, 2
    %v335 = vmax.f32 %v333, %v334
    %v336 = vrot.slane %v335, 1
    %v337 = vmax.f32 %v335, %v336
    %v338 = vsel %vm292, %v244, -inf
    %v339 = vsel %vm292, %v249, -inf
    %v340 = vmax.f32 %v338, %v339
    %v341 = vrot.slane %v340, 4
    %v342 = vmax.f32 %v340, %v341
    %v343 = vrot.slane %v342, 2
    %v344 = vmax.f32 %v342, %v343
    %v345 = vrot.slane %v344, 1
    %v346 = vmax.f32 %v344, %v345
    %v347 = vsel %vm292, %v254, -inf
    %v348 = vsel %vm292, %v259, -inf
    %v349 = vmax.f32 %v347, %v348
    %v350 = vrot.slane %v349, 4
    %v351 = vmax.f32 %v349, %v350
    %v352 = vrot.slane %v351, 2
    %v353 = vmax.f32 %v351, %v352
    %v354 = vrot.slane %v353, 1
    %v355 = vmax.f32 %v353, %v354
    %v356 = vsel %vm292, %v264, -inf
    %v357 = vsel %vm292, %v269, -inf
    %v358 = vmax.f32 %v356, %v357
    %v359 = vrot.slane %v358, 4
    %v360 = vmax.f32 %v358, %v359
    %v361 = vrot.slane %v360, 2
    %v362 = vmax.f32 %v360, %v361
    %v363 = vrot.slane %v362, 1
    %v364 = vmax.f32 %v362, %v363
    %v365 = vsel %vm292, %v274, -inf
    %v366 = vsel %vm292, %v279, -inf
    %v367 = vmax.f32 %v365, %v366
    %v368 = vrot.slane %v367, 4
    %v369 = vmax.f32 %v367, %v368
    %v370 = vrot.slane %v369, 2
    %v371 = vmax.f32 %v369, %v370
    %v372 = vrot.slane %v371, 1
    %v373 = vmax.f32 %v371, %v372
    %v374 = vsel %vm292, %v284, -inf
    %v375 = vsel %vm292, %v289, -inf
    %v376 = vmax.f32 %v374, %v375
    %v377 = vrot.slane %v376, 4
    %v378 = vmax.f32 %v376, %v377
    %v379 = vrot.slane %v378, 2
    %v380 = vmax.f32 %v378, %v379
    %v381 = vrot.slane %v380, 1
    %v382 = vmax.f32 %v380, %v381
    %v383 = vld [vmem:[%s2] sm:$0x1]
    %v385 = vlaneseq
    %v386 = vshrl.u32 %v385, 7
    %v387 = vsub.s32 0, %v386
    %v388 = vrot.slane %v383, %v387
    %v390 = vadd.f32 %v301, %v388
    %v391 = vadd.f32 %v310, %v388
    %v392 = vadd.f32 %v319, %v388
    %v393 = vadd.f32 %v328, %v388
    %v394 = vadd.f32 %v337, %v388
    %v395 = vadd.f32 %v346, %v388
    %v396 = vadd.f32 %v355, %v388
    %v397 = vadd.f32 %v364, %v388
    %v398 = vadd.f32 %v373, %v388
    %v399 = vadd.f32 %v382, %v388
    %v400 = vld [vmem:[%s3] sm:$0xff]
    %v401 = vld [vmem:[%s3 + $0x8] sm:$0xff]
    %v402 = vld [vmem:[%s3 + $0x10] sm:$0xff]
    %v403 = vld [vmem:[%s3 + $0x18] sm:$0xff]
    %v404 = vld [vmem:[%s4] sm:$0x1]
    %v406 = vlaneseq
    %v407 = vshrl.u32 %v406, 7
    %v408 = vsub.s32 0, %v407
    %v409 = vrot.slane %v404, %v408
    %v421 = vrot.slane %v391, 7
    %vm422 = vcmask 1041409
    %v423 = vsel %vm422, %v421, %v390
    %v424 = vrot.slane %v392, 6
    %vm425 = vcmask 1042434
    %v426 = vsel %vm425, %v424, %v423
    %v427 = vrot.slane %v393, 5
    %vm428 = vcmask 1043459
    %v429 = vsel %vm428, %v427, %v426
    %v430 = vrot.slane %v394, 4
    %vm431 = vcmask 1044484
    %v432 = vsel %vm431, %v430, %v429
    %v433 = vrot.slane %v395, 3
    %vm434 = vcmask 1045509
    %v435 = vsel %vm434, %v433, %v432
    %v436 = vrot.slane %v396, 2
    %vm437 = vcmask 1046534
    %v438 = vsel %vm437, %v436, %v435
    %v439 = vrot.slane %v397, 1
    %vm440 = vcmask 1047559
    %v441 = vsel %vm440, %v439, %v438
    %v442 = vrot.slane %v399, 7
    %v443 = vsel %vm422, %v442, %v398
    %v444 = vsel %vm292, %v441, 0
    %v446 = vsel %vm292, %v443, 0
    %448 = vmatprep.subr.mxu0 0.0
    %449 = vmatpush1.msra.mxu0 0.0
    %450 = vmatprep.subr.mxu0 0.0
    %451 = vmatpush1.msra.mxu0 0.0
    %452 = vmatprep.subr.mxu0 0.0
    %453 = vmatpush1.msra.mxu0 0.0
    %454 = vmatprep.subr.mxu0 0.0
    %455 = vmatpush1.msra.mxu0 0.0
    %456 = vmatprep.subr.mxu0 0.0
    %457 = vmatpush1.msra.mxu0 0.0
    %458 = vmatprep.subr.mxu0 0.0
    %459 = vmatpush1.msra.mxu0 0.0
    %460 = vmatprep.subr.mxu0 0.0
    %461 = vmatpush1.msra.mxu0 0.0
    %462 = vmatprep.subr.mxu0 0.0
    %463 = vmatpush1.msra.mxu0 0.0
    %464 = vmatprep.subr.mxu0 0.0
    %465 = vmatpush1.msra.mxu0 0.0
    %466 = vmatprep.subr.mxu0 0.0
    %467 = vmatpush1.msra.mxu0 0.0
    %468 = vmatprep.subr.mxu0 0.0
    %469 = vmatpush1.msra.mxu0 0.0
    %470 = vmatprep.subr.mxu0 0.0
    %471 = vmatpush1.msra.mxu0 0.0
    %472 = vmatprep.subr.mxu0 0.0
    %473 = vmatpush1.msra.mxu0 %v403
    %474 = vmatprep.subr.mxu0 0.0
    %475 = vmatpush1.msra.mxu0 %v402
    %476 = vmatprep.subr.mxu0 0.0
    %477 = vmatpush1.msra.mxu0 %v401
    %478 = vmatprep.subr.mxu0 0.0
    %479 = vmatpush1.msra.mxu0 %v400
    %480 = vmatprep.subr.mxu0 0.0
    %481 = vmatpush2.msra.mxu0 0.0
    %482 = vmatprep.subr.mxu0 0.0
    %483 = vmatpush2.msra.mxu0 0.0
    %484 = vmatprep.subr.mxu0 0.0
    %485 = vmatpush2.msra.mxu0 0.0
    %486 = vmatprep.subr.mxu0 0.0
    %487 = vmatpush2.msra.mxu0 0.0
    %488 = vmatprep.subr.mxu0 0.0
    %489 = vmatpush2.msra.mxu0 0.0
    %490 = vmatprep.subr.mxu0 0.0
    %491 = vmatpush2.msra.mxu0 0.0
    %492 = vmatprep.subr.mxu0 0.0
    %493 = vmatpush2.msra.mxu0 0.0
    %494 = vmatprep.subr.mxu0 0.0
    %495 = vmatpush2.msra.mxu0 0.0
    %496 = vmatprep.subr.mxu0 0.0
    %497 = vmatpush2.msra.mxu0 0.0
    %498 = vmatprep.subr.mxu0 0.0
    %499 = vmatpush2.msra.mxu0 0.0
    %500 = vmatprep.subr.mxu0 0.0
    %501 = vmatpush2.msra.mxu0 0.0
    %502 = vmatprep.subr.mxu0 0.0
    %503 = vmatpush2.msra.mxu0 0.0
    %504 = vmatprep.subr.mxu0 0.0
    %505 = vmatpush2.msra.mxu0 0.0
    %506 = vmatprep.subr.mxu0 0.0
    %507 = vmatpush2.msra.mxu0 0.0
    %508 = vmatprep.subr.mxu0 0.0
    %509 = vmatpush2.msra.mxu0 0.0
    %510 = vmatprep.subr.mxu0 0.0
    %511 = vmatpush2.msra.mxu0 0.0
    %512 = vmatprep.mubr.f32.mxu0 0.0
    %513 = vmatmul.mubr.f32.gmra.mxu0 %v444
    %v514 = vpop.f32.mrf.mxu0
    %v515 = vadd.f32 %v409, %v514
    %v516 = vpop.f32.mrf.mxu0
    %517 = vmatprep.mubr.f32.mxu0 0.0
    %518 = vmatmul.mubr.f32.gmra.mxu0 %v446
    %v519 = vpop.f32.mrf.mxu0
    %v520 = vadd.f32 %v409, %v519
    %v521 = vpop.f32.mrf.mxu0
    %522 = vdwg.mxu0
    %v523 = vmax.f32 %v515, 0.0
    %v524 = vmax.f32 %v520, 0.0
    %v525 = vld [vmem:[%s5] sm:$0xff]
    %v526 = vld [vmem:[%s5 + $0x8] sm:$0xff]
    %v527 = vld [vmem:[%s5 + $0x10] sm:$0xff]
    %v528 = vld [vmem:[%s5 + $0x18] sm:$0xff]
    %v529 = vld [vmem:[%s5 + $0x20] sm:$0xff]
    %v530 = vld [vmem:[%s5 + $0x28] sm:$0xff]
    %v531 = vld [vmem:[%s5 + $0x30] sm:$0xff]
    %v532 = vld [vmem:[%s6] sm:$0x1]
    %v534 = vlaneseq
    %v535 = vshrl.u32 %v534, 7
    %v536 = vsub.s32 0, %v535
    %v537 = vrot.slane %v532, %v536
    %vm539 = vcmask 457728
    %v541 = vsel %vm539, %v523, 0
    %v544 = vsel %vm539, %v524, 0
    %546 = vmatprep.subr.mxu0 0.0
    %547 = vmatpush1.msra.mxu0 0.0
    %548 = vmatprep.subr.mxu0 0.0
    %549 = vmatpush1.msra.mxu0 0.0
    %550 = vmatprep.subr.mxu0 0.0
    %551 = vmatpush1.msra.mxu0 0.0
    %552 = vmatprep.subr.mxu0 0.0
    %553 = vmatpush1.msra.mxu0 0.0
    %554 = vmatprep.subr.mxu0 0.0
    %555 = vmatpush1.msra.mxu0 0.0
    %556 = vmatprep.subr.mxu0 0.0
    %557 = vmatpush1.msra.mxu0 0.0
    %558 = vmatprep.subr.mxu0 0.0
    %559 = vmatpush1.msra.mxu0 0.0
    %560 = vmatprep.subr.mxu0 0.0
    %561 = vmatpush1.msra.mxu0 0.0
    %562 = vmatprep.subr.mxu0 0.0
    %563 = vmatpush1.msra.mxu0 0.0
    %564 = vmatprep.subr.mxu0 0.0
    %565 = vmatpush1.msra.mxu0 %v531
    %566 = vmatprep.subr.mxu0 0.0
    %567 = vmatpush1.msra.mxu0 %v530
    %568 = vmatprep.subr.mxu0 0.0
    %569 = vmatpush1.msra.mxu0 %v529
    %570 = vmatprep.subr.mxu0 0.0
    %571 = vmatpush1.msra.mxu0 %v528
    %572 = vmatprep.subr.mxu0 0.0
    %573 = vmatpush1.msra.mxu0 %v527
    %574 = vmatprep.subr.mxu0 0.0
    %575 = vmatpush1.msra.mxu0 %v526
    %576 = vmatprep.subr.mxu0 0.0
    %577 = vmatpush1.msra.mxu0 %v525
    %578 = vmatprep.subr.mxu0 0.0
    %579 = vmatpush2.msra.mxu0 0.0
    %580 = vmatprep.subr.mxu0 0.0
    %581 = vmatpush2.msra.mxu0 0.0
    %582 = vmatprep.subr.mxu0 0.0
    %583 = vmatpush2.msra.mxu0 0.0
    %584 = vmatprep.subr.mxu0 0.0
    %585 = vmatpush2.msra.mxu0 0.0
    %586 = vmatprep.subr.mxu0 0.0
    %587 = vmatpush2.msra.mxu0 0.0
    %588 = vmatprep.subr.mxu0 0.0
    %589 = vmatpush2.msra.mxu0 0.0
    %590 = vmatprep.subr.mxu0 0.0
    %591 = vmatpush2.msra.mxu0 0.0
    %592 = vmatprep.subr.mxu0 0.0
    %593 = vmatpush2.msra.mxu0 0.0
    %594 = vmatprep.subr.mxu0 0.0
    %595 = vmatpush2.msra.mxu0 0.0
    %596 = vmatprep.subr.mxu0 0.0
    %597 = vmatpush2.msra.mxu0 0.0
    %598 = vmatprep.subr.mxu0 0.0
    %599 = vmatpush2.msra.mxu0 0.0
    %600 = vmatprep.subr.mxu0 0.0
    %601 = vmatpush2.msra.mxu0 0.0
    %602 = vmatprep.subr.mxu0 0.0
    %603 = vmatpush2.msra.mxu0 0.0
    %604 = vmatprep.subr.mxu0 0.0
    %605 = vmatpush2.msra.mxu0 0.0
    %606 = vmatprep.subr.mxu0 0.0
    %607 = vmatpush2.msra.mxu0 0.0
    %608 = vmatprep.subr.mxu0 0.0
    %609 = vmatpush2.msra.mxu0 0.0
    %610 = vmatprep.mubr.f32.mxu0 0.0
    %611 = vmatmul.mubr.f32.gmra.mxu0 %v541
    %v612 = vpop.f32.mrf.mxu0
    %v613 = vadd.f32 %v537, %v612
    %v614 = vpop.f32.mrf.mxu0
    %615 = vmatprep.mubr.f32.mxu0 0.0
    %616 = vmatmul.mubr.f32.gmra.mxu0 %v544
    %v617 = vpop.f32.mrf.mxu0
    %v618 = vadd.f32 %v537, %v617
    %v619 = vpop.f32.mrf.mxu0
    %620 = vdwg.mxu0
    %v621 = vmax.f32 %v613, 0.0
    %v622 = vmax.f32 %v618, 0.0
    %v623 = vld [vmem:[%s7] sm:$0xff]
    %v624 = vld [vmem:[%s7 + $0x8] sm:$0xff]
    %v625 = vld [vmem:[%s7 + $0x10] sm:$0xff]
    %v626 = vld [vmem:[%s7 + $0x18] sm:$0xff]
    %v627 = vld [vmem:[%s7 + $0x20] sm:$0xff]
    %v628 = vld [vmem:[%s8] sm:$0x1]
    %v630 = vlaneseq
    %v631 = vshrl.u32 %v630, 7
    %v632 = vsub.s32 0, %v631
    %v633 = vrot.slane %v628, %v632
    %vm635 = vcmask 326656
    %v637 = vsel %vm635, %v621, 0
    %v640 = vsel %vm635, %v622, 0
    %642 = vmatprep.subr.mxu0 0.0
    %643 = vmatpush1.msra.mxu0 0.0
    %644 = vmatprep.subr.mxu0 0.0
    %645 = vmatpush1.msra.mxu0 0.0
    %646 = vmatprep.subr.mxu0 0.0
    %647 = vmatpush1.msra.mxu0 0.0
    %648 = vmatprep.subr.mxu0 0.0
    %649 = vmatpush1.msra.mxu0 0.0
    %650 = vmatprep.subr.mxu0 0.0
    %651 = vmatpush1.msra.mxu0 0.0
    %652 = vmatprep.subr.mxu0 0.0
    %653 = vmatpush1.msra.mxu0 0.0
    %654 = vmatprep.subr.mxu0 0.0
    %655 = vmatpush1.msra.mxu0 0.0
    %656 = vmatprep.subr.mxu0 0.0
    %657 = vmatpush1.msra.mxu0 0.0
    %658 = vmatprep.subr.mxu0 0.0
    %659 = vmatpush1.msra.mxu0 0.0
    %660 = vmatprep.subr.mxu0 0.0
    %661 = vmatpush1.msra.mxu0 0.0
    %662 = vmatprep.subr.mxu0 0.0
    %663 = vmatpush1.msra.mxu0 0.0
    %664 = vmatprep.subr.mxu0 0.0
    %665 = vmatpush1.msra.mxu0 %v627
    %666 = vmatprep.subr.mxu0 0.0
    %667 = vmatpush1.msra.mxu0 %v626
    %668 = vmatprep.subr.mxu0 0.0
    %669 = vmatpush1.msra.mxu0 %v625
    %670 = vmatprep.subr.mxu0 0.0
    %671 = vmatpush1.msra.mxu0 %v624
    %672 = vmatprep.subr.mxu0 0.0
    %673 = vmatpush1.msra.mxu0 %v623
    %674 = vmatprep.subr.mxu0 0.0
    %675 = vmatpush2.msra.mxu0 0.0
    %676 = vmatprep.subr.mxu0 0.0
    %677 = vmatpush2.msra.mxu0 0.0
    %678 = vmatprep.subr.mxu0 0.0
    %679 = vmatpush2.msra.mxu0 0.0
    %680 = vmatprep.subr.mxu0 0.0
    %681 = vmatpush2.msra.mxu0 0.0
    %682 = vmatprep.subr.mxu0 0.0
    %683 = vmatpush2.msra.mxu0 0.0
    %684 = vmatprep.subr.mxu0 0.0
    %685 = vmatpush2.msra.mxu0 0.0
    %686 = vmatprep.subr.mxu0 0.0
    %687 = vmatpush2.msra.mxu0 0.0
    %688 = vmatprep.subr.mxu0 0.0
    %689 = vmatpush2.msra.mxu0 0.0
    %690 = vmatprep.subr.mxu0 0.0
    %691 = vmatpush2.msra.mxu0 0.0
    %692 = vmatprep.subr.mxu0 0.0
    %693 = vmatpush2.msra.mxu0 0.0
    %694 = vmatprep.subr.mxu0 0.0
    %695 = vmatpush2.msra.mxu0 0.0
    %696 = vmatprep.subr.mxu0 0.0
    %697 = vmatpush2.msra.mxu0 0.0
    %698 = vmatprep.subr.mxu0 0.0
    %699 = vmatpush2.msra.mxu0 0.0
    %700 = vmatprep.subr.mxu0 0.0
    %701 = vmatpush2.msra.mxu0 0.0
    %702 = vmatprep.subr.mxu0 0.0
    %703 = vmatpush2.msra.mxu0 0.0
    %704 = vmatprep.subr.mxu0 0.0
    %705 = vmatpush2.msra.mxu0 0.0
    %706 = vmatprep.mubr.f32.mxu0 0.0
    %707 = vmatmul.mubr.f32.gmra.mxu0 %v637
    %v708 = vpop.f32.mrf.mxu0
    %v709 = vadd.f32 %v633, %v708
    %v710 = vpop.f32.mrf.mxu0
    %711 = vmatprep.mubr.f32.mxu0 0.0
    %712 = vmatmul.mubr.f32.gmra.mxu0 %v640
    %v713 = vpop.f32.mrf.mxu0
    %v714 = vadd.f32 %v633, %v713
    %v715 = vpop.f32.mrf.mxu0
    %716 = vdwg.mxu0
    %v717 = vmax.f32 %v709, 0.0
    %v718 = vmax.f32 %v714, 0.0
    %v719 = vld [vmem:[%s9] sm:$0xff]
    %v720 = vld [vmem:[%s9 + $0x8] sm:$0xff]
    %v721 = vld [vmem:[%s9 + $0x10] sm:$0xff]
    %v722 = vld [vmem:[%s9 + $0x18] sm:$0xff]
    %v723 = vld [vmem:[%s9 + $0x20] sm:$0xff]
    %v724 = vld [vmem:[%s9 + $0x28] sm:$0xff]
    %v725 = vld [vmem:[%s9 + $0x30] sm:$0xff]
    %v726 = vld [vmem:[%s9 + $0x38] sm:$0xff]
    %v727 = vld [vmem:[%s10] sm:$0x3]
    %v729 = vlaneseq
    %v730 = vshrl.u32 %v729, 7
    %v731 = vsub.s32 0, %v730
    %v732 = vrot.slane %v727, %v731
    %v733 = vlaneseq
    %v734 = vshrl.u32 %v733, 7
    %v735 = vsub.s32 1, %v734
    %v736 = vrot.slane %v727, %v735
    %v740 = vsel %vm292, %v717, 0
    %v743 = vsel %vm292, %v718, 0
    %745 = vmatprep.subr.mxu0 0.0
    %746 = vmatpush1.msra.mxu0 0.0
    %747 = vmatprep.subr.mxu0 0.0
    %748 = vmatpush1.msra.mxu0 0.0
    %749 = vmatprep.subr.mxu0 0.0
    %750 = vmatpush1.msra.mxu0 0.0
    %751 = vmatprep.subr.mxu0 0.0
    %752 = vmatpush1.msra.mxu0 0.0
    %753 = vmatprep.subr.mxu0 0.0
    %754 = vmatpush1.msra.mxu0 0.0
    %755 = vmatprep.subr.mxu0 0.0
    %756 = vmatpush1.msra.mxu0 0.0
    %757 = vmatprep.subr.mxu0 0.0
    %758 = vmatpush1.msra.mxu0 0.0
    %759 = vmatprep.subr.mxu0 0.0
    %760 = vmatpush1.msra.mxu0 0.0
    %761 = vmatprep.subr.mxu0 0.0
    %762 = vmatpush1.msra.mxu0 0.0
    %763 = vmatprep.subr.mxu0 0.0
    %764 = vmatpush1.msra.mxu0 0.0
    %765 = vmatprep.subr.mxu0 0.0
    %766 = vmatpush1.msra.mxu0 0.0
    %767 = vmatprep.subr.mxu0 0.0
    %768 = vmatpush1.msra.mxu0 0.0
    %769 = vmatprep.subr.mxu0 %v726
    %770 = vmatpush1.msra.mxu0 %v725
    %771 = vmatprep.subr.mxu0 %v724
    %772 = vmatpush1.msra.mxu0 %v723
    %773 = vmatprep.subr.mxu0 %v722
    %774 = vmatpush1.msra.mxu0 %v721
    %775 = vmatprep.subr.mxu0 %v720
    %776 = vmatpush1.msra.mxu0 %v719
    %777 = vmatprep.subr.mxu0 0.0
    %778 = vmatpush2.msra.mxu0 0.0
    %779 = vmatprep.subr.mxu0 0.0
    %780 = vmatpush2.msra.mxu0 0.0
    %781 = vmatprep.subr.mxu0 0.0
    %782 = vmatpush2.msra.mxu0 0.0
    %783 = vmatprep.subr.mxu0 0.0
    %784 = vmatpush2.msra.mxu0 0.0
    %785 = vmatprep.subr.mxu0 0.0
    %786 = vmatpush2.msra.mxu0 0.0
    %787 = vmatprep.subr.mxu0 0.0
    %788 = vmatpush2.msra.mxu0 0.0
    %789 = vmatprep.subr.mxu0 0.0
    %790 = vmatpush2.msra.mxu0 0.0
    %791 = vmatprep.subr.mxu0 0.0
    %792 = vmatpush2.msra.mxu0 0.0
    %793 = vmatprep.subr.mxu0 0.0
    %794 = vmatpush2.msra.mxu0 0.0
    %795 = vmatprep.subr.mxu0 0.0
    %796 = vmatpush2.msra.mxu0 0.0
    %797 = vmatprep.subr.mxu0 0.0
    %798 = vmatpush2.msra.mxu0 0.0
    %799 = vmatprep.subr.mxu0 0.0
    %800 = vmatpush2.msra.mxu0 0.0
    %801 = vmatprep.subr.mxu0 0.0
    %802 = vmatpush2.msra.mxu0 0.0
    %803 = vmatprep.subr.mxu0 0.0
    %804 = vmatpush2.msra.mxu0 0.0
    %805 = vmatprep.subr.mxu0 0.0
    %806 = vmatpush2.msra.mxu0 0.0
    %807 = vmatprep.subr.mxu0 0.0
    %808 = vmatpush2.msra.mxu0 0.0
    %809 = vmatprep.mubr.f32.mxu0 0.0
    %810 = vmatmul.mubr.f32.gmra.mxu0 %v740
    %v811 = vpop.f32.mrf.mxu0
    %v812 = vadd.f32 %v732, %v811
    %v813 = vpop.f32.mrf.mxu0
    %v814 = vadd.f32 %v736, %v813
    %815 = vmatprep.mubr.f32.mxu0 0.0
    %816 = vmatmul.mubr.f32.gmra.mxu0 %v743
    %v817 = vpop.f32.mrf.mxu0
    %v818 = vadd.f32 %v732, %v817
    %v819 = vpop.f32.mrf.mxu0
    %v820 = vadd.f32 %v736, %v819
    %821 = vdwg.mxu0
    %v822 = vmax.f32 %v812, 0.0
    %v823 = vmax.f32 %v814, 0.0
    %v824 = vmax.f32 %v818, 0.0
    %v825 = vmax.f32 %v820, 0.0
    %v826 = vld [vmem:[%s11] sm:$0xff]
    %v827 = vld [vmem:[%s11 + $0x8] sm:$0xff]
    %v828 = vld [vmem:[%s11 + $0x10] sm:$0xff]
    %v829 = vld [vmem:[%s11 + $0x18] sm:$0xff]
    %v830 = vld [vmem:[%s11 + $0x20] sm:$0xff]
    %v831 = vld [vmem:[%s11 + $0x28] sm:$0xff]
    %v832 = vld [vmem:[%s11 + $0x30] sm:$0xff]
    %v833 = vld [vmem:[%s11 + $0x38] sm:$0xff]
    %v834 = vld [vmem:[%s11 + $0x40] sm:$0xff]
    %v835 = vld [vmem:[%s11 + $0x48] sm:$0xff]
    %v836 = vld [vmem:[%s11 + $0x50] sm:$0xff]
    %v837 = vld [vmem:[%s11 + $0x58] sm:$0xff]
    %v838 = vld [vmem:[%s11 + $0x60] sm:$0xff]
    %v839 = vld [vmem:[%s11 + $0x68] sm:$0xff]
    %v840 = vld [vmem:[%s11 + $0x70] sm:$0xff]
    %v841 = vld [vmem:[%s11 + $0x78] sm:$0xff]
    %v842 = vld [vmem:[%s11 + $0x80] sm:$0x1]
    %v843 = vld [vmem:[%s11 + $0x88] sm:$0xff]
    %v844 = vld [vmem:[%s11 + $0x90] sm:$0xff]
    %v845 = vld [vmem:[%s11 + $0x98] sm:$0xff]
    %v846 = vld [vmem:[%s11 + $0xa0] sm:$0xff]
    %v847 = vld [vmem:[%s11 + $0xa8] sm:$0xff]
    %v848 = vld [vmem:[%s11 + $0xb0] sm:$0xff]
    %v849 = vld [vmem:[%s11 + $0xb8] sm:$0xff]
    %v850 = vld [vmem:[%s11 + $0xc0] sm:$0xff]
    %v851 = vld [vmem:[%s11 + $0xc8] sm:$0xff]
    %v852 = vld [vmem:[%s11 + $0xd0] sm:$0xff]
    %v853 = vld [vmem:[%s11 + $0xd8] sm:$0xff]
    %v854 = vld [vmem:[%s11 + $0xe0] sm:$0xff]
    %v855 = vld [vmem:[%s11 + $0xe8] sm:$0xff]
    %v856 = vld [vmem:[%s11 + $0xf0] sm:$0xff]
    %v857 = vld [vmem:[%s11 + $0xf8] sm:$0xff]
    %v858 = vld [vmem:[%s11 + $0x100] sm:$0xff]
    %v859 = vld [vmem:[%s11 + $0x108] sm:$0x1]
    %v860 = vld [vmem:[%s11 + $0x110] sm:$0xff]
    %v861 = vld [vmem:[%s11 + $0x118] sm:$0xff]
    %v862 = vld [vmem:[%s11 + $0x120] sm:$0xff]
    %v863 = vld [vmem:[%s11 + $0x128] sm:$0xff]
    %v864 = vld [vmem:[%s11 + $0x130] sm:$0xff]
    %v865 = vld [vmem:[%s11 + $0x138] sm:$0xff]
    %v866 = vld [vmem:[%s11 + $0x140] sm:$0xff]
    %v867 = vld [vmem:[%s11 + $0x148] sm:$0xff]
    %v868 = vld [vmem:[%s11 + $0x150] sm:$0xff]
    %v869 = vld [vmem:[%s11 + $0x158] sm:$0xff]
    %v870 = vld [vmem:[%s11 + $0x160] sm:$0xff]
    %v871 = vld [vmem:[%s11 + $0x168] sm:$0xff]
    %v872 = vld [vmem:[%s11 + $0x170] sm:$0xff]
    %v873 = vld [vmem:[%s11 + $0x178] sm:$0xff]
    %v874 = vld [vmem:[%s11 + $0x180] sm:$0xff]
    %v875 = vld [vmem:[%s11 + $0x188] sm:$0xff]
    %v876 = vld [vmem:[%s11 + $0x190] sm:$0x1]
    %v877 = vld [vmem:[%s11 + $0x198] sm:$0xff]
    %v878 = vld [vmem:[%s11 + $0x1a0] sm:$0xff]
    %v879 = vld [vmem:[%s11 + $0x1a8] sm:$0xff]
    %v880 = vld [vmem:[%s11 + $0x1b0] sm:$0xff]
    %v881 = vld [vmem:[%s11 + $0x1b8] sm:$0xff]
    %v882 = vld [vmem:[%s11 + $0x1c0] sm:$0xff]
    %v883 = vld [vmem:[%s11 + $0x1c8] sm:$0xff]
    %v884 = vld [vmem:[%s11 + $0x1d0] sm:$0xff]
    %v885 = vld [vmem:[%s11 + $0x1d8] sm:$0xff]
    %v886 = vld [vmem:[%s11 + $0x1e0] sm:$0xff]
    %v887 = vld [vmem:[%s11 + $0x1e8] sm:$0xff]
    %v888 = vld [vmem:[%s11 + $0x1f0] sm:$0xff]
    %v889 = vld [vmem:[%s11 + $0x1f8] sm:$0xff]
    %v890 = vld [vmem:[%s11 + $0x200] sm:$0xff]
    %v891 = vld [vmem:[%s11 + $0x208] sm:$0xff]
    %v892 = vld [vmem:[%s11 + $0x210] sm:$0xff]
    %v893 = vld [vmem:[%s11 + $0x218] sm:$0x1]
    %v894 = vld [vmem:[%s11 + $0x220] sm:$0xff]
    %v895 = vld [vmem:[%s11 + $0x228] sm:$0xff]
    %v896 = vld [vmem:[%s11 + $0x230] sm:$0xff]
    %v897 = vld [vmem:[%s11 + $0x238] sm:$0xff]
    %v898 = vld [vmem:[%s11 + $0x240] sm:$0xff]
    %v899 = vld [vmem:[%s11 + $0x248] sm:$0xff]
    %v900 = vld [vmem:[%s11 + $0x250] sm:$0xff]
    %v901 = vld [vmem:[%s11 + $0x258] sm:$0xff]
    %v902 = vld [vmem:[%s11 + $0x260] sm:$0xff]
    %v903 = vld [vmem:[%s11 + $0x268] sm:$0xff]
    %v904 = vld [vmem:[%s11 + $0x270] sm:$0xff]
    %v905 = vld [vmem:[%s11 + $0x278] sm:$0xff]
    %v906 = vld [vmem:[%s11 + $0x280] sm:$0xff]
    %v907 = vld [vmem:[%s11 + $0x288] sm:$0xff]
    %v908 = vld [vmem:[%s11 + $0x290] sm:$0xff]
    %v909 = vld [vmem:[%s11 + $0x298] sm:$0xff]
    %v910 = vld [vmem:[%s11 + $0x2a0] sm:$0x1]
    %v911 = vld [vmem:[%s11 + $0x2a8] sm:$0xff]
    %v912 = vld [vmem:[%s11 + $0x2b0] sm:$0xff]
    %v913 = vld [vmem:[%s11 + $0x2b8] sm:$0xff]
    %v914 = vld [vmem:[%s11 + $0x2c0] sm:$0xff]
    %v915 = vld [vmem:[%s11 + $0x2c8] sm:$0xff]
    %v916 = vld [vmem:[%s11 + $0x2d0] sm:$0xff]
    %v917 = vld [vmem:[%s11 + $0x2d8] sm:$0xff]
    %v918 = vld [vmem:[%s11 + $0x2e0] sm:$0xff]
    %v919 = vld [vmem:[%s11 + $0x2e8] sm:$0xff]
    %v920 = vld [vmem:[%s11 + $0x2f0] sm:$0xff]
    %v921 = vld [vmem:[%s11 + $0x2f8] sm:$0xff]
    %v922 = vld [vmem:[%s11 + $0x300] sm:$0xff]
    %v923 = vld [vmem:[%s11 + $0x308] sm:$0xff]
    %v924 = vld [vmem:[%s11 + $0x310] sm:$0xff]
    %v925 = vld [vmem:[%s11 + $0x318] sm:$0xff]
    %v926 = vld [vmem:[%s11 + $0x320] sm:$0xff]
    %v927 = vld [vmem:[%s11 + $0x328] sm:$0x1]
    %v928 = vld [vmem:[%s11 + $0x330] sm:$0xff]
    %v929 = vld [vmem:[%s11 + $0x338] sm:$0xff]
    %v930 = vld [vmem:[%s11 + $0x340] sm:$0xff]
    %v931 = vld [vmem:[%s11 + $0x348] sm:$0xff]
    %v932 = vld [vmem:[%s11 + $0x350] sm:$0xff]
    %v933 = vld [vmem:[%s11 + $0x358] sm:$0xff]
    %v934 = vld [vmem:[%s11 + $0x360] sm:$0xff]
    %v935 = vld [vmem:[%s11 + $0x368] sm:$0xff]
    %v936 = vld [vmem:[%s11 + $0x370] sm:$0xff]
    %v937 = vld [vmem:[%s11 + $0x378] sm:$0xff]
    %v938 = vld [vmem:[%s11 + $0x380] sm:$0xff]
    %v939 = vld [vmem:[%s11 + $0x388] sm:$0xff]
    %v940 = vld [vmem:[%s11 + $0x390] sm:$0xff]
    %v941 = vld [vmem:[%s11 + $0x398] sm:$0xff]
    %v942 = vld [vmem:[%s11 + $0x3a0] sm:$0xff]
    %v943 = vld [vmem:[%s11 + $0x3a8] sm:$0xff]
    %v944 = vld [vmem:[%s11 + $0x3b0] sm:$0x1]
    %v945 = vld [vmem:[%s11 + $0x3b8] sm:$0xff]
    %v946 = vld [vmem:[%s11 + $0x3c0] sm:$0xff]
    %v947 = vld [vmem:[%s11 + $0x3c8] sm:$0xff]
    %v948 = vld [vmem:[%s11 + $0x3d0] sm:$0xff]
    %v949 = vld [vmem:[%s11 + $0x3d8] sm:$0xff]
    %v950 = vld [vmem:[%s11 + $0x3e0] sm:$0xff]
    %v951 = vld [vmem:[%s11 + $0x3e8] sm:$0xff]
    %v952 = vld [vmem:[%s11 + $0x3f0] sm:$0xff]
    %v953 = vld [vmem:[%s11 + $0x3f8] sm:$0xff]
    %v954 = vld [vmem:[%s11 + $0x400] sm:$0xff]
    %v955 = vld [vmem:[%s11 + $0x408] sm:$0xff]
    %v956 = vld [vmem:[%s11 + $0x410] sm:$0xff]
    %v957 = vld [vmem:[%s11 + $0x418] sm:$0xff]
    %v958 = vld [vmem:[%s11 + $0x420] sm:$0xff]
    %v959 = vld [vmem:[%s11 + $0x428] sm:$0xff]
    %v960 = vld [vmem:[%s11 + $0x430] sm:$0xff]
    %v961 = vld [vmem:[%s11 + $0x438] sm:$0x1]
    %v962 = vld [vmem:[%s11 + $0x440] sm:$0xff]
    %v963 = vld [vmem:[%s11 + $0x448] sm:$0xff]
    %v964 = vld [vmem:[%s11 + $0x450] sm:$0xff]
    %v965 = vld [vmem:[%s11 + $0x458] sm:$0xff]
    %v966 = vld [vmem:[%s11 + $0x460] sm:$0xff]
    %v967 = vld [vmem:[%s11 + $0x468] sm:$0xff]
    %v968 = vld [vmem:[%s11 + $0x470] sm:$0xff]
    %v969 = vld [vmem:[%s11 + $0x478] sm:$0xff]
    %v970 = vld [vmem:[%s11 + $0x480] sm:$0xff]
    %v971 = vld [vmem:[%s11 + $0x488] sm:$0xff]
    %v972 = vld [vmem:[%s11 + $0x490] sm:$0xff]
    %v973 = vld [vmem:[%s11 + $0x498] sm:$0xff]
    %v974 = vld [vmem:[%s11 + $0x4a0] sm:$0xff]
    %v975 = vld [vmem:[%s11 + $0x4a8] sm:$0xff]
    %v976 = vld [vmem:[%s11 + $0x4b0] sm:$0xff]
    %v977 = vld [vmem:[%s11 + $0x4b8] sm:$0xff]
    %v978 = vld [vmem:[%s11 + $0x4c0] sm:$0x1]
    %v979 = vld [vmem:[%s11 + $0x4c8] sm:$0xff]
    %v980 = vld [vmem:[%s11 + $0x4d0] sm:$0xff]
    %v981 = vld [vmem:[%s11 + $0x4d8] sm:$0xff]
    %v982 = vld [vmem:[%s11 + $0x4e0] sm:$0xff]
    %v983 = vld [vmem:[%s11 + $0x4e8] sm:$0xff]
    %v984 = vld [vmem:[%s11 + $0x4f0] sm:$0xff]
    %v985 = vld [vmem:[%s11 + $0x4f8] sm:$0xff]
    %v986 = vld [vmem:[%s11 + $0x500] sm:$0xff]
    %v987 = vld [vmem:[%s11 + $0x508] sm:$0xff]
    %v988 = vld [vmem:[%s11 + $0x510] sm:$0xff]
    %v989 = vld [vmem:[%s11 + $0x518] sm:$0xff]
    %v990 = vld [vmem:[%s11 + $0x520] sm:$0xff]
    %v991 = vld [vmem:[%s11 + $0x528] sm:$0xff]
    %v992 = vld [vmem:[%s11 + $0x530] sm:$0xff]
    %v993 = vld [vmem:[%s11 + $0x538] sm:$0xff]
    %v994 = vld [vmem:[%s11 + $0x540] sm:$0xff]
    %v995 = vld [vmem:[%s11 + $0x548] sm:$0x1]
    %v996 = vld [vmem:[%s12] sm:$0x1]
    %vm997 = vcmask 7168
    %v999 = vsel %vm997, %v823, 0
    %vm1001 = vcmask 1040384
    %v1003 = vsel %vm1001, %v842, 0
    %1005 = vmatprep.subr.mxu0 0.0
    %1006 = vmatpush1.msra.mxu0 %v841
    %1007 = vmatprep.subr.mxu0 0.0
    %1008 = vmatpush1.msra.mxu0 %v840
    %1009 = vmatprep.subr.mxu0 0.0
    %1010 = vmatpush1.msra.mxu0 %v839
    %1011 = vmatprep.subr.mxu0 0.0
    %1012 = vmatpush1.msra.mxu0 %v838
    %1013 = vmatprep.subr.mxu0 0.0
    %1014 = vmatpush1.msra.mxu0 %v837
    %1015 = vmatprep.subr.mxu0 0.0
    %1016 = vmatpush1.msra.mxu0 %v836
    %1017 = vmatprep.subr.mxu0 0.0
    %1018 = vmatpush1.msra.mxu0 %v835
    %1019 = vmatprep.subr.mxu0 0.0
    %1020 = vmatpush1.msra.mxu0 %v834
    %1021 = vmatprep.subr.mxu0 0.0
    %1022 = vmatpush1.msra.mxu0 %v833
    %1023 = vmatprep.subr.mxu0 0.0
    %1024 = vmatpush1.msra.mxu0 %v832
    %1025 = vmatprep.subr.mxu0 0.0
    %1026 = vmatpush1.msra.mxu0 %v831
    %1027 = vmatprep.subr.mxu0 0.0
    %1028 = vmatpush1.msra.mxu0 %v830
    %1029 = vmatprep.subr.mxu0 0.0
    %1030 = vmatpush1.msra.mxu0 %v829
    %1031 = vmatprep.subr.mxu0 0.0
    %1032 = vmatpush1.msra.mxu0 %v828
    %1033 = vmatprep.subr.mxu0 0.0
    %1034 = vmatpush1.msra.mxu0 %v827
    %1035 = vmatprep.subr.mxu0 0.0
    %1036 = vmatpush1.msra.mxu0 %v826
    %1037 = vmatprep.subr.mxu0 0.0
    %1038 = vmatpush2.msra.mxu0 0.0
    %1039 = vmatprep.subr.mxu0 0.0
    %1040 = vmatpush2.msra.mxu0 0.0
    %1041 = vmatprep.subr.mxu0 0.0
    %1042 = vmatpush2.msra.mxu0 0.0
    %1043 = vmatprep.subr.mxu0 0.0
    %1044 = vmatpush2.msra.mxu0 0.0
    %1045 = vmatprep.subr.mxu0 0.0
    %1046 = vmatpush2.msra.mxu0 0.0
    %1047 = vmatprep.subr.mxu0 0.0
    %1048 = vmatpush2.msra.mxu0 0.0
    %1049 = vmatprep.subr.mxu0 0.0
    %1050 = vmatpush2.msra.mxu0 0.0
    %1051 = vmatprep.subr.mxu0 0.0
    %1052 = vmatpush2.msra.mxu0 0.0
    %1053 = vmatprep.subr.mxu0 0.0
    %1054 = vmatpush2.msra.mxu0 0.0
    %1055 = vmatprep.subr.mxu0 0.0
    %1056 = vmatpush2.msra.mxu0 0.0
    %1057 = vmatprep.subr.mxu0 0.0
    %1058 = vmatpush2.msra.mxu0 0.0
    %1059 = vmatprep.subr.mxu0 0.0
    %1060 = vmatpush2.msra.mxu0 0.0
    %1061 = vmatprep.subr.mxu0 0.0
    %1062 = vmatpush2.msra.mxu0 0.0
    %1063 = vmatprep.subr.mxu0 0.0
    %1064 = vmatpush2.msra.mxu0 0.0
    %1065 = vmatprep.subr.mxu0 0.0
    %1066 = vmatpush2.msra.mxu0 0.0
    %1067 = vmatprep.subr.mxu0 0.0
    %1068 = vmatpush2.msra.mxu0 %v1003
    %1069 = vmatprep.mubr.f32.mxu0 %v999
    %1070 = vmatmul.mubr.f32.gmra.mxu0 %v822
    %v1071 = vpop.f32.mrf.mxu0
    %v1072 = vadd.f32 0.0, %v1071
    %v1073 = vpop.f32.mrf.mxu0
    %1074 = vdwg.mxu0
    %v1075 = vadd.f32 %v996, %v1072
    %v1077 = vrot.slane %v822, 1
    %v1078 = vrot.slane %v823, 1
    %v1080 = vsel %vm997, %v1078, 0
    %v1083 = vsel %vm1001, %v859, 0
    %1085 = vmatprep.subr.mxu0 0.0
    %1086 = vmatpush1.msra.mxu0 %v858
    %1087 = vmatprep.subr.mxu0 0.0
    %1088 = vmatpush1.msra.mxu0 %v857
    %1089 = vmatprep.subr.mxu0 0.0
    %1090 = vmatpush1.msra.mxu0 %v856
    %1091 = vmatprep.subr.mxu0 0.0
    %1092 = vmatpush1.msra.mxu0 %v855
    %1093 = vmatprep.subr.mxu0 0.0
    %1094 = vmatpush1.msra.mxu0 %v854
    %1095 = vmatprep.subr.mxu0 0.0
    %1096 = vmatpush1.msra.mxu0 %v853
    %1097 = vmatprep.subr.mxu0 0.0
    %1098 = vmatpush1.msra.mxu0 %v852
    %1099 = vmatprep.subr.mxu0 0.0
    %1100 = vmatpush1.msra.mxu0 %v851
    %1101 = vmatprep.subr.mxu0 0.0
    %1102 = vmatpush1.msra.mxu0 %v850
    %1103 = vmatprep.subr.mxu0 0.0
    %1104 = vmatpush1.msra.mxu0 %v849
    %1105 = vmatprep.subr.mxu0 0.0
    %1106 = vmatpush1.msra.mxu0 %v848
    %1107 = vmatprep.subr.mxu0 0.0
    %1108 = vmatpush1.msra.mxu0 %v847
    %1109 = vmatprep.subr.mxu0 0.0
    %1110 = vmatpush1.msra.mxu0 %v846
    %1111 = vmatprep.subr.mxu0 0.0
    %1112 = vmatpush1.msra.mxu0 %v845
    %1113 = vmatprep.subr.mxu0 0.0
    %1114 = vmatpush1.msra.mxu0 %v844
    %1115 = vmatprep.subr.mxu0 0.0
    %1116 = vmatpush1.msra.mxu0 %v843
    %1117 = vmatprep.subr.mxu0 0.0
    %1118 = vmatpush2.msra.mxu0 0.0
    %1119 = vmatprep.subr.mxu0 0.0
    %1120 = vmatpush2.msra.mxu0 0.0
    %1121 = vmatprep.subr.mxu0 0.0
    %1122 = vmatpush2.msra.mxu0 0.0
    %1123 = vmatprep.subr.mxu0 0.0
    %1124 = vmatpush2.msra.mxu0 0.0
    %1125 = vmatprep.subr.mxu0 0.0
    %1126 = vmatpush2.msra.mxu0 0.0
    %1127 = vmatprep.subr.mxu0 0.0
    %1128 = vmatpush2.msra.mxu0 0.0
    %1129 = vmatprep.subr.mxu0 0.0
    %1130 = vmatpush2.msra.mxu0 0.0
    %1131 = vmatprep.subr.mxu0 0.0
    %1132 = vmatpush2.msra.mxu0 0.0
    %1133 = vmatprep.subr.mxu0 0.0
    %1134 = vmatpush2.msra.mxu0 0.0
    %1135 = vmatprep.subr.mxu0 0.0
    %1136 = vmatpush2.msra.mxu0 0.0
    %1137 = vmatprep.subr.mxu0 0.0
    %1138 = vmatpush2.msra.mxu0 0.0
    %1139 = vmatprep.subr.mxu0 0.0
    %1140 = vmatpush2.msra.mxu0 0.0
    %1141 = vmatprep.subr.mxu0 0.0
    %1142 = vmatpush2.msra.mxu0 0.0
    %1143 = vmatprep.subr.mxu0 0.0
    %1144 = vmatpush2.msra.mxu0 0.0
    %1145 = vmatprep.subr.mxu0 0.0
    %1146 = vmatpush2.msra.mxu0 0.0
    %1147 = vmatprep.subr.mxu0 0.0
    %1148 = vmatpush2.msra.mxu0 %v1083
    %1149 = vmatprep.mubr.f32.mxu0 %v1080
    %1150 = vmatmul.mubr.f32.gmra.mxu0 %v1077
    %v1151 = vpop.f32.mrf.mxu0
    %v1152 = vadd.f32 0.0, %v1151
    %v1153 = vpop.f32.mrf.mxu0
    %1154 = vdwg.mxu0
    %v1155 = vadd.f32 %v1075, %v1152
    %v1156 = vrot.slane %v822, 2
    %v1157 = vrot.slane %v823, 2
    %v1159 = vsel %vm997, %v1157, 0
    %v1162 = vsel %vm1001, %v876, 0
    %1164 = vmatprep.subr.mxu0 0.0
    %1165 = vmatpush1.msra.mxu0 %v875
    %1166 = vmatprep.subr.mxu0 0.0
    %1167 = vmatpush1.msra.mxu0 %v874
    %1168 = vmatprep.subr.mxu0 0.0
    %1169 = vmatpush1.msra.mxu0 %v873
    %1170 = vmatprep.subr.mxu0 0.0
    %1171 = vmatpush1.msra.mxu0 %v872
    %1172 = vmatprep.subr.mxu0 0.0
    %1173 = vmatpush1.msra.mxu0 %v871
    %1174 = vmatprep.subr.mxu0 0.0
    %1175 = vmatpush1.msra.mxu0 %v870
    %1176 = vmatprep.subr.mxu0 0.0
    %1177 = vmatpush1.msra.mxu0 %v869
    %1178 = vmatprep.subr.mxu0 0.0
    %1179 = vmatpush1.msra.mxu0 %v868
    %1180 = vmatprep.subr.mxu0 0.0
    %1181 = vmatpush1.msra.mxu0 %v867
    %1182 = vmatprep.subr.mxu0 0.0
    %1183 = vmatpush1.msra.mxu0 %v866
    %1184 = vmatprep.subr.mxu0 0.0
    %1185 = vmatpush1.msra.mxu0 %v865
    %1186 = vmatprep.subr.mxu0 0.0
    %1187 = vmatpush1.msra.mxu0 %v864
    %1188 = vmatprep.subr.mxu0 0.0
    %1189 = vmatpush1.msra.mxu0 %v863
    %1190 = vmatprep.subr.mxu0 0.0
    %1191 = vmatpush1.msra.mxu0 %v862
    %1192 = vmatprep.subr.mxu0 0.0
    %1193 = vmatpush1.msra.mxu0 %v861
    %1194 = vmatprep.subr.mxu0 0.0
    %1195 = vmatpush1.msra.mxu0 %v860
    %1196 = vmatprep.subr.mxu0 0.0
    %1197 = vmatpush2.msra.mxu0 0.0
    %1198 = vmatprep.subr.mxu0 0.0
    %1199 = vmatpush2.msra.mxu0 0.0
    %1200 = vmatprep.subr.mxu0 0.0
    %1201 = vmatpush2.msra.mxu0 0.0
    %1202 = vmatprep.subr.mxu0 0.0
    %1203 = vmatpush2.msra.mxu0 0.0
    %1204 = vmatprep.subr.mxu0 0.0
    %1205 = vmatpush2.msra.mxu0 0.0
    %1206 = vmatprep.subr.mxu0 0.0
    %1207 = vmatpush2.msra.mxu0 0.0
    %1208 = vmatprep.subr.mxu0 0.0
    %1209 = vmatpush2.msra.mxu0 0.0
    %1210 = vmatprep.subr.mxu0 0.0
    %1211 = vmatpush2.msra.mxu0 0.0
    %1212 = vmatprep.subr.mxu0 0.0
    %1213 = vmatpush2.msra.mxu0 0.0
    %1214 = vmatprep.subr.mxu0 0.0
    %1215 = vmatpush2.msra.mxu0 0.0
    %1216 = vmatprep.subr.mxu0 0.0
    %1217 = vmatpush2.msra.mxu0 0.0
    %1218 = vmatprep.subr.mxu0 0.0
    %1219 = vmatpush2.msra.mxu0 0.0
    %1220 = vmatprep.subr.mxu0 0.0
    %1221 = vmatpush2.msra.mxu0 0.0
    %1222 = vmatprep.subr.mxu0 0.0
    %1223 = vmatpush2.msra.mxu0 0.0
    %1224 = vmatprep.subr.mxu0 0.0
    %1225 = vmatpush2.msra.mxu0 0.0
    %1226 = vmatprep.subr.mxu0 0.0
    %1227 = vmatpush2.msra.mxu0 %v1162
    %1228 = vmatprep.mubr.f32.mxu0 %v1159
    %1229 = vmatmul.mubr.f32.gmra.mxu0 %v1156
    %v1230 = vpop.f32.mrf.mxu0
    %v1231 = vadd.f32 0.0, %v1230
    %v1232 = vpop.f32.mrf.mxu0
    %1233 = vdwg.mxu0
    %v1234 = vadd.f32 %v1155, %v1231
    %v1235 = vrot.slane %v822, 3
    %v1236 = vrot.slane %v823, 3
    %v1238 = vsel %vm997, %v1236, 0
    %v1241 = vsel %vm1001, %v893, 0
    %1243 = vmatprep.subr.mxu0 0.0
    %1244 = vmatpush1.msra.mxu0 %v892
    %1245 = vmatprep.subr.mxu0 0.0
    %1246 = vmatpush1.msra.mxu0 %v891
    %1247 = vmatprep.subr.mxu0 0.0
    %1248 = vmatpush1.msra.mxu0 %v890
    %1249 = vmatprep.subr.mxu0 0.0
    %1250 = vmatpush1.msra.mxu0 %v889
    %1251 = vmatprep.subr.mxu0 0.0
    %1252 = vmatpush1.msra.mxu0 %v888
    %1253 = vmatprep.subr.mxu0 0.0
    %1254 = vmatpush1.msra.mxu0 %v887
    %1255 = vmatprep.subr.mxu0 0.0
    %1256 = vmatpush1.msra.mxu0 %v886
    %1257 = vmatprep.subr.mxu0 0.0
    %1258 = vmatpush1.msra.mxu0 %v885
    %1259 = vmatprep.subr.mxu0 0.0
    %1260 = vmatpush1.msra.mxu0 %v884
    %1261 = vmatprep.subr.mxu0 0.0
    %1262 = vmatpush1.msra.mxu0 %v883
    %1263 = vmatprep.subr.mxu0 0.0
    %1264 = vmatpush1.msra.mxu0 %v882
    %1265 = vmatprep.subr.mxu0 0.0
    %1266 = vmatpush1.msra.mxu0 %v881
    %1267 = vmatprep.subr.mxu0 0.0
    %1268 = vmatpush1.msra.mxu0 %v880
    %1269 = vmatprep.subr.mxu0 0.0
    %1270 = vmatpush1.msra.mxu0 %v879
    %1271 = vmatprep.subr.mxu0 0.0
    %1272 = vmatpush1.msra.mxu0 %v878
    %1273 = vmatprep.subr.mxu0 0.0
    %1274 = vmatpush1.msra.mxu0 %v877
    %1275 = vmatprep.subr.mxu0 0.0
    %1276 = vmatpush2.msra.mxu0 0.0
    %1277 = vmatprep.subr.mxu0 0.0
    %1278 = vmatpush2.msra.mxu0 0.0
    %1279 = vmatprep.subr.mxu0 0.0
    %1280 = vmatpush2.msra.mxu0 0.0
    %1281 = vmatprep.subr.mxu0 0.0
    %1282 = vmatpush2.msra.mxu0 0.0
    %1283 = vmatprep.subr.mxu0 0.0
    %1284 = vmatpush2.msra.mxu0 0.0
    %1285 = vmatprep.subr.mxu0 0.0
    %1286 = vmatpush2.msra.mxu0 0.0
    %1287 = vmatprep.subr.mxu0 0.0
    %1288 = vmatpush2.msra.mxu0 0.0
    %1289 = vmatprep.subr.mxu0 0.0
    %1290 = vmatpush2.msra.mxu0 0.0
    %1291 = vmatprep.subr.mxu0 0.0
    %1292 = vmatpush2.msra.mxu0 0.0
    %1293 = vmatprep.subr.mxu0 0.0
    %1294 = vmatpush2.msra.mxu0 0.0
    %1295 = vmatprep.subr.mxu0 0.0
    %1296 = vmatpush2.msra.mxu0 0.0
    %1297 = vmatprep.subr.mxu0 0.0
    %1298 = vmatpush2.msra.mxu0 0.0
    %1299 = vmatprep.subr.mxu0 0.0
    %1300 = vmatpush2.msra.mxu0 0.0
    %1301 = vmatprep.subr.mxu0 0.0
    %1302 = vmatpush2.msra.mxu0 0.0
    %1303 = vmatprep.subr.mxu0 0.0
    %1304 = vmatpush2.msra.mxu0 0.0
    %1305 = vmatprep.subr.mxu0 0.0
    %1306 = vmatpush2.msra.mxu0 %v1241
    %1307 = vmatprep.mubr.f32.mxu0 %v1238
    %1308 = vmatmul.mubr.f32.gmra.mxu0 %v1235
    %v1309 = vpop.f32.mrf.mxu0
    %v1310 = vadd.f32 0.0, %v1309
    %v1311 = vpop.f32.mrf.mxu0
    %1312 = vdwg.mxu0
    %v1313 = vadd.f32 %v1234, %v1310
    %v1314 = vrot.slane %v822, 4
    %v1315 = vrot.slane %v823, 4
    %v1317 = vsel %vm997, %v1315, 0
    %v1320 = vsel %vm1001, %v910, 0
    %1322 = vmatprep.subr.mxu0 0.0
    %1323 = vmatpush1.msra.mxu0 %v909
    %1324 = vmatprep.subr.mxu0 0.0
    %1325 = vmatpush1.msra.mxu0 %v908
    %1326 = vmatprep.subr.mxu0 0.0
    %1327 = vmatpush1.msra.mxu0 %v907
    %1328 = vmatprep.subr.mxu0 0.0
    %1329 = vmatpush1.msra.mxu0 %v906
    %1330 = vmatprep.subr.mxu0 0.0
    %1331 = vmatpush1.msra.mxu0 %v905
    %1332 = vmatprep.subr.mxu0 0.0
    %1333 = vmatpush1.msra.mxu0 %v904
    %1334 = vmatprep.subr.mxu0 0.0
    %1335 = vmatpush1.msra.mxu0 %v903
    %1336 = vmatprep.subr.mxu0 0.0
    %1337 = vmatpush1.msra.mxu0 %v902
    %1338 = vmatprep.subr.mxu0 0.0
    %1339 = vmatpush1.msra.mxu0 %v901
    %1340 = vmatprep.subr.mxu0 0.0
    %1341 = vmatpush1.msra.mxu0 %v900
    %1342 = vmatprep.subr.mxu0 0.0
    %1343 = vmatpush1.msra.mxu0 %v899
    %1344 = vmatprep.subr.mxu0 0.0
    %1345 = vmatpush1.msra.mxu0 %v898
    %1346 = vmatprep.subr.mxu0 0.0
    %1347 = vmatpush1.msra.mxu0 %v897
    %1348 = vmatprep.subr.mxu0 0.0
    %1349 = vmatpush1.msra.mxu0 %v896
    %1350 = vmatprep.subr.mxu0 0.0
    %1351 = vmatpush1.msra.mxu0 %v895
    %1352 = vmatprep.subr.mxu0 0.0
    %1353 = vmatpush1.msra.mxu0 %v894
    %1354 = vmatprep.subr.mxu0 0.0
    %1355 = vmatpush2.msra.mxu0 0.0
    %1356 = vmatprep.subr.mxu0 0.0
    %1357 = vmatpush2.msra.mxu0 0.0
    %1358 = vmatprep.subr.mxu0 0.0
    %1359 = vmatpush2.msra.mxu0 0.0
    %1360 = vmatprep.subr.mxu0 0.0
    %1361 = vmatpush2.msra.mxu0 0.0
    %1362 = vmatprep.subr.mxu0 0.0
    %1363 = vmatpush2.msra.mxu0 0.0
    %1364 = vmatprep.subr.mxu0 0.0
    %1365 = vmatpush2.msra.mxu0 0.0
    %1366 = vmatprep.subr.mxu0 0.0
    %1367 = vmatpush2.msra.mxu0 0.0
    %1368 = vmatprep.subr.mxu0 0.0
    %1369 = vmatpush2.msra.mxu0 0.0
    %1370 = vmatprep.subr.mxu0 0.0
    %1371 = vmatpush2.msra.mxu0 0.0
    %1372 = vmatprep.subr.mxu0 0.0
    %1373 = vmatpush2.msra.mxu0 0.0
    %1374 = vmatprep.subr.mxu0 0.0
    %1375 = vmatpush2.msra.mxu0 0.0
    %1376 = vmatprep.subr.mxu0 0.0
    %1377 = vmatpush2.msra.mxu0 0.0
    %1378 = vmatprep.subr.mxu0 0.0
    %1379 = vmatpush2.msra.mxu0 0.0
    %1380 = vmatprep.subr.mxu0 0.0
    %1381 = vmatpush2.msra.mxu0 0.0
    %1382 = vmatprep.subr.mxu0 0.0
    %1383 = vmatpush2.msra.mxu0 0.0
    %1384 = vmatprep.subr.mxu0 0.0
    %1385 = vmatpush2.msra.mxu0 %v1320
    %1386 = vmatprep.mubr.f32.mxu0 %v1317
    %1387 = vmatmul.mubr.f32.gmra.mxu0 %v1314
    %v1388 = vpop.f32.mrf.mxu0
    %v1389 = vadd.f32 0.0, %v1388
    %v1390 = vpop.f32.mrf.mxu0
    %1391 = vdwg.mxu0
    %v1392 = vadd.f32 %v1313, %v1389
    %v1393 = vrot.slane %v822, 5
    %v1394 = vrot.slane %v823, 5
    %v1396 = vsel %vm997, %v1394, 0
    %v1399 = vsel %vm1001, %v927, 0
    %1401 = vmatprep.subr.mxu0 0.0
    %1402 = vmatpush1.msra.mxu0 %v926
    %1403 = vmatprep.subr.mxu0 0.0
    %1404 = vmatpush1.msra.mxu0 %v925
    %1405 = vmatprep.subr.mxu0 0.0
    %1406 = vmatpush1.msra.mxu0 %v924
    %1407 = vmatprep.subr.mxu0 0.0
    %1408 = vmatpush1.msra.mxu0 %v923
    %1409 = vmatprep.subr.mxu0 0.0
    %1410 = vmatpush1.msra.mxu0 %v922
    %1411 = vmatprep.subr.mxu0 0.0
    %1412 = vmatpush1.msra.mxu0 %v921
    %1413 = vmatprep.subr.mxu0 0.0
    %1414 = vmatpush1.msra.mxu0 %v920
    %1415 = vmatprep.subr.mxu0 0.0
    %1416 = vmatpush1.msra.mxu0 %v919
    %1417 = vmatprep.subr.mxu0 0.0
    %1418 = vmatpush1.msra.mxu0 %v918
    %1419 = vmatprep.subr.mxu0 0.0
    %1420 = vmatpush1.msra.mxu0 %v917
    %1421 = vmatprep.subr.mxu0 0.0
    %1422 = vmatpush1.msra.mxu0 %v916
    %1423 = vmatprep.subr.mxu0 0.0
    %1424 = vmatpush1.msra.mxu0 %v915
    %1425 = vmatprep.subr.mxu0 0.0
    %1426 = vmatpush1.msra.mxu0 %v914
    %1427 = vmatprep.subr.mxu0 0.0
    %1428 = vmatpush1.msra.mxu0 %v913
    %1429 = vmatprep.subr.mxu0 0.0
    %1430 = vmatpush1.msra.mxu0 %v912
    %1431 = vmatprep.subr.mxu0 0.0
    %1432 = vmatpush1.msra.mxu0 %v911
    %1433 = vmatprep.subr.mxu0 0.0
    %1434 = vmatpush2.msra.mxu0 0.0
    %1435 = vmatprep.subr.mxu0 0.0
    %1436 = vmatpush2.msra.mxu0 0.0
    %1437 = vmatprep.subr.mxu0 0.0
    %1438 = vmatpush2.msra.mxu0 0.0
    %1439 = vmatprep.subr.mxu0 0.0
    %1440 = vmatpush2.msra.mxu0 0.0
    %1441 = vmatprep.subr.mxu0 0.0
    %1442 = vmatpush2.msra.mxu0 0.0
    %1443 = vmatprep.subr.mxu0 0.0
    %1444 = vmatpush2.msra.mxu0 0.0
    %1445 = vmatprep.subr.mxu0 0.0
    %1446 = vmatpush2.msra.mxu0 0.0
    %1447 = vmatprep.subr.mxu0 0.0
    %1448 = vmatpush2.msra.mxu0 0.0
    %1449 = vmatprep.subr.mxu0 0.0
    %1450 = vmatpush2.msra.mxu0 0.0
    %1451 = vmatprep.subr.mxu0 0.0
    %1452 = vmatpush2.msra.mxu0 0.0
    %1453 = vmatprep.subr.mxu0 0.0
    %1454 = vmatpush2.msra.mxu0 0.0
    %1455 = vmatprep.subr.mxu0 0.0
    %1456 = vmatpush2.msra.mxu0 0.0
    %1457 = vmatprep.subr.mxu0 0.0
    %1458 = vmatpush2.msra.mxu0 0.0
    %1459 = vmatprep.subr.mxu0 0.0
    %1460 = vmatpush2.msra.mxu0 0.0
    %1461 = vmatprep.subr.mxu0 0.0
    %1462 = vmatpush2.msra.mxu0 0.0
    %1463 = vmatprep.subr.mxu0 0.0
    %1464 = vmatpush2.msra.mxu0 %v1399
    %1465 = vmatprep.mubr.f32.mxu0 %v1396
    %1466 = vmatmul.mubr.f32.gmra.mxu0 %v1393
    %v1467 = vpop.f32.mrf.mxu0
    %v1468 = vadd.f32 0.0, %v1467
    %v1469 = vpop.f32.mrf.mxu0
    %1470 = vdwg.mxu0
    %v1471 = vadd.f32 %v1392, %v1468
    %v1472 = vrot.slane %v822, 6
    %v1473 = vrot.slane %v823, 6
    %v1475 = vsel %vm997, %v1473, 0
    %v1478 = vsel %vm1001, %v944, 0
    %1480 = vmatprep.subr.mxu0 0.0
    %1481 = vmatpush1.msra.mxu0 %v943
    %1482 = vmatprep.subr.mxu0 0.0
    %1483 = vmatpush1.msra.mxu0 %v942
    %1484 = vmatprep.subr.mxu0 0.0
    %1485 = vmatpush1.msra.mxu0 %v941
    %1486 = vmatprep.subr.mxu0 0.0
    %1487 = vmatpush1.msra.mxu0 %v940
    %1488 = vmatprep.subr.mxu0 0.0
    %1489 = vmatpush1.msra.mxu0 %v939
    %1490 = vmatprep.subr.mxu0 0.0
    %1491 = vmatpush1.msra.mxu0 %v938
    %1492 = vmatprep.subr.mxu0 0.0
    %1493 = vmatpush1.msra.mxu0 %v937
    %1494 = vmatprep.subr.mxu0 0.0
    %1495 = vmatpush1.msra.mxu0 %v936
    %1496 = vmatprep.subr.mxu0 0.0
    %1497 = vmatpush1.msra.mxu0 %v935
    %1498 = vmatprep.subr.mxu0 0.0
    %1499 = vmatpush1.msra.mxu0 %v934
    %1500 = vmatprep.subr.mxu0 0.0
    %1501 = vmatpush1.msra.mxu0 %v933
    %1502 = vmatprep.subr.mxu0 0.0
    %1503 = vmatpush1.msra.mxu0 %v932
    %1504 = vmatprep.subr.mxu0 0.0
    %1505 = vmatpush1.msra.mxu0 %v931
    %1506 = vmatprep.subr.mxu0 0.0
    %1507 = vmatpush1.msra.mxu0 %v930
    %1508 = vmatprep.subr.mxu0 0.0
    %1509 = vmatpush1.msra.mxu0 %v929
    %1510 = vmatprep.subr.mxu0 0.0
    %1511 = vmatpush1.msra.mxu0 %v928
    %1512 = vmatprep.subr.mxu0 0.0
    %1513 = vmatpush2.msra.mxu0 0.0
    %1514 = vmatprep.subr.mxu0 0.0
    %1515 = vmatpush2.msra.mxu0 0.0
    %1516 = vmatprep.subr.mxu0 0.0
    %1517 = vmatpush2.msra.mxu0 0.0
    %1518 = vmatprep.subr.mxu0 0.0
    %1519 = vmatpush2.msra.mxu0 0.0
    %1520 = vmatprep.subr.mxu0 0.0
    %1521 = vmatpush2.msra.mxu0 0.0
    %1522 = vmatprep.subr.mxu0 0.0
    %1523 = vmatpush2.msra.mxu0 0.0
    %1524 = vmatprep.subr.mxu0 0.0
    %1525 = vmatpush2.msra.mxu0 0.0
    %1526 = vmatprep.subr.mxu0 0.0
    %1527 = vmatpush2.msra.mxu0 0.0
    %1528 = vmatprep.subr.mxu0 0.0
    %1529 = vmatpush2.msra.mxu0 0.0
    %1530 = vmatprep.subr.mxu0 0.0
    %1531 = vmatpush2.msra.mxu0 0.0
    %1532 = vmatprep.subr.mxu0 0.0
    %1533 = vmatpush2.msra.mxu0 0.0
    %1534 = vmatprep.subr.mxu0 0.0
    %1535 = vmatpush2.msra.mxu0 0.0
    %1536 = vmatprep.subr.mxu0 0.0
    %1537 = vmatpush2.msra.mxu0 0.0
    %1538 = vmatprep.subr.mxu0 0.0
    %1539 = vmatpush2.msra.mxu0 0.0
    %1540 = vmatprep.subr.mxu0 0.0
    %1541 = vmatpush2.msra.mxu0 0.0
    %1542 = vmatprep.subr.mxu0 0.0
    %1543 = vmatpush2.msra.mxu0 %v1478
    %1544 = vmatprep.mubr.f32.mxu0 %v1475
    %1545 = vmatmul.mubr.f32.gmra.mxu0 %v1472
    %v1546 = vpop.f32.mrf.mxu0
    %v1547 = vadd.f32 0.0, %v1546
    %v1548 = vpop.f32.mrf.mxu0
    %1549 = vdwg.mxu0
    %v1550 = vadd.f32 %v1471, %v1547
    %v1551 = vrot.slane %v822, 7
    %v1552 = vrot.slane %v823, 7
    %v1554 = vsel %vm997, %v1552, 0
    %v1557 = vsel %vm1001, %v961, 0
    %1559 = vmatprep.subr.mxu0 0.0
    %1560 = vmatpush1.msra.mxu0 %v960
    %1561 = vmatprep.subr.mxu0 0.0
    %1562 = vmatpush1.msra.mxu0 %v959
    %1563 = vmatprep.subr.mxu0 0.0
    %1564 = vmatpush1.msra.mxu0 %v958
    %1565 = vmatprep.subr.mxu0 0.0
    %1566 = vmatpush1.msra.mxu0 %v957
    %1567 = vmatprep.subr.mxu0 0.0
    %1568 = vmatpush1.msra.mxu0 %v956
    %1569 = vmatprep.subr.mxu0 0.0
    %1570 = vmatpush1.msra.mxu0 %v955
    %1571 = vmatprep.subr.mxu0 0.0
    %1572 = vmatpush1.msra.mxu0 %v954
    %1573 = vmatprep.subr.mxu0 0.0
    %1574 = vmatpush1.msra.mxu0 %v953
    %1575 = vmatprep.subr.mxu0 0.0
    %1576 = vmatpush1.msra.mxu0 %v952
    %1577 = vmatprep.subr.mxu0 0.0
    %1578 = vmatpush1.msra.mxu0 %v951
    %1579 = vmatprep.subr.mxu0 0.0
    %1580 = vmatpush1.msra.mxu0 %v950
    %1581 = vmatprep.subr.mxu0 0.0
    %1582 = vmatpush1.msra.mxu0 %v949
    %1583 = vmatprep.subr.mxu0 0.0
    %1584 = vmatpush1.msra.mxu0 %v948
    %1585 = vmatprep.subr.mxu0 0.0
    %1586 = vmatpush1.msra.mxu0 %v947
    %1587 = vmatprep.subr.mxu0 0.0
    %1588 = vmatpush1.msra.mxu0 %v946
    %1589 = vmatprep.subr.mxu0 0.0
    %1590 = vmatpush1.msra.mxu0 %v945
    %1591 = vmatprep.subr.mxu0 0.0
    %1592 = vmatpush2.msra.mxu0 0.0
    %1593 = vmatprep.subr.mxu0 0.0
    %1594 = vmatpush2.msra.mxu0 0.0
    %1595 = vmatprep.subr.mxu0 0.0
    %1596 = vmatpush2.msra.mxu0 0.0
    %1597 = vmatprep.subr.mxu0 0.0
    %1598 = vmatpush2.msra.mxu0 0.0
    %1599 = vmatprep.subr.mxu0 0.0
    %1600 = vmatpush2.msra.mxu0 0.0
    %1601 = vmatprep.subr.mxu0 0.0
    %1602 = vmatpush2.msra.mxu0 0.0
    %1603 = vmatprep.subr.mxu0 0.0
    %1604 = vmatpush2.msra.mxu0 0.0
    %1605 = vmatprep.subr.mxu0 0.0
    %1606 = vmatpush2.msra.mxu0 0.0
    %1607 = vmatprep.subr.mxu0 0.0
    %1608 = vmatpush2.msra.mxu0 0.0
    %1609 = vmatprep.subr.mxu0 0.0
    %1610 = vmatpush2.msra.mxu0 0.0
    %1611 = vmatprep.subr.mxu0 0.0
    %1612 = vmatpush2.msra.mxu0 0.0
    %1613 = vmatprep.subr.mxu0 0.0
    %1614 = vmatpush2.msra.mxu0 0.0
    %1615 = vmatprep.subr.mxu0 0.0
    %1616 = vmatpush2.msra.mxu0 0.0
    %1617 = vmatprep.subr.mxu0 0.0
    %1618 = vmatpush2.msra.mxu0 0.0
    %1619 = vmatprep.subr.mxu0 0.0
    %1620 = vmatpush2.msra.mxu0 0.0
    %1621 = vmatprep.subr.mxu0 0.0
    %1622 = vmatpush2.msra.mxu0 %v1557
    %1623 = vmatprep.mubr.f32.mxu0 %v1554
    %1624 = vmatmul.mubr.f32.gmra.mxu0 %v1551
    %v1625 = vpop.f32.mrf.mxu0
    %v1626 = vadd.f32 0.0, %v1625
    %v1627 = vpop.f32.mrf.mxu0
    %1628 = vdwg.mxu0
    %v1629 = vadd.f32 %v1550, %v1626
    %v1631 = vsel %vm997, %v825, 0
    %v1634 = vsel %vm1001, %v978, 0
    %1636 = vmatprep.subr.mxu0 0.0
    %1637 = vmatpush1.msra.mxu0 %v977
    %1638 = vmatprep.subr.mxu0 0.0
    %1639 = vmatpush1.msra.mxu0 %v976
    %1640 = vmatprep.subr.mxu0 0.0
    %1641 = vmatpush1.msra.mxu0 %v975
    %1642 = vmatprep.subr.mxu0 0.0
    %1643 = vmatpush1.msra.mxu0 %v974
    %1644 = vmatprep.subr.mxu0 0.0
    %1645 = vmatpush1.msra.mxu0 %v973
    %1646 = vmatprep.subr.mxu0 0.0
    %1647 = vmatpush1.msra.mxu0 %v972
    %1648 = vmatprep.subr.mxu0 0.0
    %1649 = vmatpush1.msra.mxu0 %v971
    %1650 = vmatprep.subr.mxu0 0.0
    %1651 = vmatpush1.msra.mxu0 %v970
    %1652 = vmatprep.subr.mxu0 0.0
    %1653 = vmatpush1.msra.mxu0 %v969
    %1654 = vmatprep.subr.mxu0 0.0
    %1655 = vmatpush1.msra.mxu0 %v968
    %1656 = vmatprep.subr.mxu0 0.0
    %1657 = vmatpush1.msra.mxu0 %v967
    %1658 = vmatprep.subr.mxu0 0.0
    %1659 = vmatpush1.msra.mxu0 %v966
    %1660 = vmatprep.subr.mxu0 0.0
    %1661 = vmatpush1.msra.mxu0 %v965
    %1662 = vmatprep.subr.mxu0 0.0
    %1663 = vmatpush1.msra.mxu0 %v964
    %1664 = vmatprep.subr.mxu0 0.0
    %1665 = vmatpush1.msra.mxu0 %v963
    %1666 = vmatprep.subr.mxu0 0.0
    %1667 = vmatpush1.msra.mxu0 %v962
    %1668 = vmatprep.subr.mxu0 0.0
    %1669 = vmatpush2.msra.mxu0 0.0
    %1670 = vmatprep.subr.mxu0 0.0
    %1671 = vmatpush2.msra.mxu0 0.0
    %1672 = vmatprep.subr.mxu0 0.0
    %1673 = vmatpush2.msra.mxu0 0.0
    %1674 = vmatprep.subr.mxu0 0.0
    %1675 = vmatpush2.msra.mxu0 0.0
    %1676 = vmatprep.subr.mxu0 0.0
    %1677 = vmatpush2.msra.mxu0 0.0
    %1678 = vmatprep.subr.mxu0 0.0
    %1679 = vmatpush2.msra.mxu0 0.0
    %1680 = vmatprep.subr.mxu0 0.0
    %1681 = vmatpush2.msra.mxu0 0.0
    %1682 = vmatprep.subr.mxu0 0.0
    %1683 = vmatpush2.msra.mxu0 0.0
    %1684 = vmatprep.subr.mxu0 0.0
    %1685 = vmatpush2.msra.mxu0 0.0
    %1686 = vmatprep.subr.mxu0 0.0
    %1687 = vmatpush2.msra.mxu0 0.0
    %1688 = vmatprep.subr.mxu0 0.0
    %1689 = vmatpush2.msra.mxu0 0.0
    %1690 = vmatprep.subr.mxu0 0.0
    %1691 = vmatpush2.msra.mxu0 0.0
    %1692 = vmatprep.subr.mxu0 0.0
    %1693 = vmatpush2.msra.mxu0 0.0
    %1694 = vmatprep.subr.mxu0 0.0
    %1695 = vmatpush2.msra.mxu0 0.0
    %1696 = vmatprep.subr.mxu0 0.0
    %1697 = vmatpush2.msra.mxu0 0.0
    %1698 = vmatprep.subr.mxu0 0.0
    %1699 = vmatpush2.msra.mxu0 %v1634
    %1700 = vmatprep.mubr.f32.mxu0 %v1631
    %1701 = vmatmul.mubr.f32.gmra.mxu0 %v824
    %v1702 = vpop.f32.mrf.mxu0
    %v1703 = vadd.f32 0.0, %v1702
    %v1704 = vpop.f32.mrf.mxu0
    %1705 = vdwg.mxu0
    %v1706 = vadd.f32 %v1629, %v1703
    %v1708 = vrot.slane %v824, 1
    %v1709 = vrot.slane %v825, 1
    %v1711 = vsel %vm997, %v1709, 0
    %v1714 = vsel %vm1001, %v995, 0
    %1716 = vmatprep.subr.mxu0 0.0
    %1717 = vmatpush1.msra.mxu0 %v994
    %1718 = vmatprep.subr.mxu0 0.0
    %1719 = vmatpush1.msra.mxu0 %v993
    %1720 = vmatprep.subr.mxu0 0.0
    %1721 = vmatpush1.msra.mxu0 %v992
    %1722 = vmatprep.subr.mxu0 0.0
    %1723 = vmatpush1.msra.mxu0 %v991
    %1724 = vmatprep.subr.mxu0 0.0
    %1725 = vmatpush1.msra.mxu0 %v990
    %1726 = vmatprep.subr.mxu0 0.0
    %1727 = vmatpush1.msra.mxu0 %v989
    %1728 = vmatprep.subr.mxu0 0.0
    %1729 = vmatpush1.msra.mxu0 %v988
    %1730 = vmatprep.subr.mxu0 0.0
    %1731 = vmatpush1.msra.mxu0 %v987
    %1732 = vmatprep.subr.mxu0 0.0
    %1733 = vmatpush1.msra.mxu0 %v986
    %1734 = vmatprep.subr.mxu0 0.0
    %1735 = vmatpush1.msra.mxu0 %v985
    %1736 = vmatprep.subr.mxu0 0.0
    %1737 = vmatpush1.msra.mxu0 %v984
    %1738 = vmatprep.subr.mxu0 0.0
    %1739 = vmatpush1.msra.mxu0 %v983
    %1740 = vmatprep.subr.mxu0 0.0
    %1741 = vmatpush1.msra.mxu0 %v982
    %1742 = vmatprep.subr.mxu0 0.0
    %1743 = vmatpush1.msra.mxu0 %v981
    %1744 = vmatprep.subr.mxu0 0.0
    %1745 = vmatpush1.msra.mxu0 %v980
    %1746 = vmatprep.subr.mxu0 0.0
    %1747 = vmatpush1.msra.mxu0 %v979
    %1748 = vmatprep.subr.mxu0 0.0
    %1749 = vmatpush2.msra.mxu0 0.0
    %1750 = vmatprep.subr.mxu0 0.0
    %1751 = vmatpush2.msra.mxu0 0.0
    %1752 = vmatprep.subr.mxu0 0.0
    %1753 = vmatpush2.msra.mxu0 0.0
    %1754 = vmatprep.subr.mxu0 0.0
    %1755 = vmatpush2.msra.mxu0 0.0
    %1756 = vmatprep.subr.mxu0 0.0
    %1757 = vmatpush2.msra.mxu0 0.0
    %1758 = vmatprep.subr.mxu0 0.0
    %1759 = vmatpush2.msra.mxu0 0.0
    %1760 = vmatprep.subr.mxu0 0.0
    %1761 = vmatpush2.msra.mxu0 0.0
    %1762 = vmatprep.subr.mxu0 0.0
    %1763 = vmatpush2.msra.mxu0 0.0
    %1764 = vmatprep.subr.mxu0 0.0
    %1765 = vmatpush2.msra.mxu0 0.0
    %1766 = vmatprep.subr.mxu0 0.0
    %1767 = vmatpush2.msra.mxu0 0.0
    %1768 = vmatprep.subr.mxu0 0.0
    %1769 = vmatpush2.msra.mxu0 0.0
    %1770 = vmatprep.subr.mxu0 0.0
    %1771 = vmatpush2.msra.mxu0 0.0
    %1772 = vmatprep.subr.mxu0 0.0
    %1773 = vmatpush2.msra.mxu0 0.0
    %1774 = vmatprep.subr.mxu0 0.0
    %1775 = vmatpush2.msra.mxu0 0.0
    %1776 = vmatprep.subr.mxu0 0.0
    %1777 = vmatpush2.msra.mxu0 0.0
    %1778 = vmatprep.subr.mxu0 0.0
    %1779 = vmatpush2.msra.mxu0 %v1714
    %1780 = vmatprep.mubr.f32.mxu0 %v1711
    %1781 = vmatmul.mubr.f32.gmra.mxu0 %v1708
    %v1782 = vpop.f32.mrf.mxu0
    %v1783 = vadd.f32 0.0, %v1782
    %v1784 = vpop.f32.mrf.mxu0
    %1785 = vdwg.mxu0
    %v1786 = vadd.f32 %v1706, %v1783
    %vm1787 = vcmask 131072
    %1788 = vst.msk [vmem:[#allocation2] sm:$0x1] %vm1787, %v1786
    // Predicated region
    $region54: #{forward.1} parent=1 // pred_check
      _
    $region55: #{forward.1} parent=1 // pred_check_branch
      %1790 = sbr.rel (0) target = $region57
    $region56: #{forward.1} parent=1 // pred_region
      %s1792 = ssub.s32 16, 16
      %1793 = vsyncadd [#allocation3], %s1792
      %s1795 = sshll.u32 [#allocation2], 4
      %s1796 = int_to_ptr.vmem [resolvable:$true] %s1795
      %1798 = dma.vmem_to_hbm [thread:$0]  %s1796, 16, %s13, [#allocation3]
    $region57: #{forward.1} parent=1 // pred_fallthru
      _
    // Predicated region
    $region58: #{forward.1} parent=1 // pred_check
      _
    $region59: #{forward.1} parent=1 // pred_check_branch
      %1800 = sbr.rel (0) target = $region61
    $region60: #{forward.1} parent=1 // pred_region
      %1801 = dma.done [#allocation3], 16
    $region61: #{forward.1} parent=1 // pred_fallthru
      _
    %1802 = vsyncpa [#allocation3], 1

</llo_original>
